<compile_context>
chip_gen: v7x
topology: tpu7x:2x2x1
jax: 0.10.0
libtpu: 0.0.40
codegen_flags: <defaults>
</compile_context>

<pallas_src>
import math

import jax
import jax.numpy as jnp
import numpy as np
from jax import lax
from jax.experimental import pallas as pl
from jax.experimental.pallas import tpu as pltpu


# ----------------------------------------------------------------------------
# Fused kernel: masked GRU recurrence + record pooling + output Linear.
# ----------------------------------------------------------------------------
def mlpl_fused_kernel(len_ref, invcnt_ref, pool_ref, x_ref, wih_ref, whh_ref,
                      bx_ref, bhn_ref, wout_ref, bout_ref, out_ref):
    # x_ref:      (S*N, H) bf16, time-major rows (row = t*N + n)
    # len_ref:    (N, 1) int32 sequence lengths
    # invcnt_ref: (B, 1) f32, exact 1/count(records with len > 0), clamped
    # pool_ref:   (B, N) bf16 0/1 record->batch pooling matrix
    # wih_ref:    (H, 3H) bf16 lane-packed input weights, gate order [r|z|n]
    # whh_ref:    (H, 3H) bf16 lane-packed hidden weights, gate order [r|z|n]
    # bx_ref:     (1, 3H) f32  = b_ih + [b_hr | b_hz | 0]  (pre-folded)
    # bhn_ref:    (1, H)  f32  = b_hn (must stay inside r * (h@W_hn + b_hn))
    # wout_ref:   (H, Vp) bf16 output weights, V zero-padded to lane-dense Vp
    # bout_ref:   (1, Vp) f32 ; out_ref: (B, Vp) f32
    SN, H = x_ref.shape
    N = len_ref.shape[0]
    S = SN // N
    H2 = 2 * H

    # --- prologue: weights / biases loaded once (hoisted out of the loop) ---
    whh = whh_ref[...]                          # (H, 3H) bf16
    bhn = bhn_ref[...]                          # (1, H)  f32

    # Hoisted input projection: ONE (S*N,H)x(H,3H) MXU op covering all gates
    # and all timesteps; r/z hidden biases already folded into bx so the
    # per-step chain carries no extra VPU bias adds.
    gx = (jnp.dot(x_ref[...], wih_ref[...], preferred_element_type=jnp.float32)
          + bx_ref[...])                        # (S*N, 3H) f32, lane-packed

    lens = len_ref[...]                         # (N, 1) int32
    h = jnp.zeros((N, H), jnp.float32)          # carried in vregs, no scratch

    # --- statically unrolled recurrence (S small & fixed) ---
    # TODO(synk): for large S switch to lax.fori_loop(unroll=2..4) with gx in
    # a VMEM scratch to bound vreg live ranges; at large N add a "parallel"
    # grid axis over records (size tiles against v7x's 64 MiB VMEM).
    for t in range(S):
        lo = t * N                              # static, sublane-aligned
        gx_t = gx[lo:lo + N, :]                 # (N, 3H)
        hb = h.astype(jnp.bfloat16)
        # Single fused recurrent matmul per step: (N,H) x (H,3H) -> (N,3H).
        gh = jnp.dot(hb, whh, preferred_element_type=jnp.float32)
        # r and z share one sigmoid slab (z is independent of the r->tanh
        # chain; transcendental count stays at 3 gates per step).
        rz = jax.nn.sigmoid(gx_t[:, :H2] + gh[:, :H2])
        r = rz[:, :H]
        z = rz[:, H:H2]
        n = jnp.tanh(gx_t[:, H2:] + r * (gh[:, H2:] + bhn))
        h_new = (1.0 - z) * n + z * h
        # pack_padded_sequence equivalent: h freezes once t >= length.
        h = jnp.where(t < lens, h_new, h)

    # --- fused head: record pooling + output Linear (bf16 MXU operands) ---
    rec = jnp.dot(pool_ref[...], h.astype(jnp.bfloat16),
                  preferred_element_type=jnp.float32)        # (B, H) sums
    logits = jnp.dot(rec.astype(jnp.bfloat16), wout_ref[...],
                     preferred_element_type=jnp.float32)     # (B, Vp)
    # (sum/count) @ W == (sum @ W) / count — exact 1/count from the wrapper.
    out_ref[...] = (logits * invcnt_ref[...] + bout_ref[...]).astype(out_ref.dtype)


def mlpl_fused_call(x_tm, lengths_n1, invcnt_b1, pool_bn,
                    wih, whh, bx, bhn, w_out_p, b_out_p):
    SN, H = x_tm.shape
    N = lengths_n1.shape[0]
    B = invcnt_b1.shape[0]
    Vp = w_out_p.shape[1]

    def full_spec(shape):
        rank = len(shape)
        return pl.BlockSpec(shape, lambda i, _r=rank: (0,) * _r)

    # Small problem: single fused block, grid=(1,).  At larger N one would
    # tile the record axis (mark it "parallel" for v7x's 2 TCs) and keep the
    # per-block gx/x footprint under v7x's 64 MiB VMEM (raise
    # vmem_limit_bytes explicitly when doing so).
    return pl.pallas_call(
        mlpl_fused_kernel,
        out_shape=jax.ShapeDtypeStruct((B, Vp), jnp.float32),
        grid_spec=pltpu.PrefetchScalarGridSpec(
            num_scalar_prefetch=0,
            grid=(1,),
            in_specs=[
                full_spec((N, 1)),            # lengths
                full_spec((B, 1)),            # exact 1/counts
                full_spec((B, N)),            # pooling matrix (bf16)
                full_spec((SN, H)),           # time-major embedded inputs (bf16)
                full_spec((H, 3 * H)),        # W_ih lane-packed [r|z|n] (bf16)
                full_spec((H, 3 * H)),        # W_hh lane-packed [r|z|n] (bf16)
                full_spec((1, 3 * H)),        # folded input-side bias
                full_spec((1, H)),            # b_hn
                full_spec((H, Vp)),           # W_out (bf16, V padded to Vp)
                full_spec((1, Vp)),           # b_out (padded)
            ],
            out_specs=full_spec((B, Vp)),
        ),
        compiler_params=pltpu.CompilerParams(
            dimension_semantics=("arbitrary",)),
    )(lengths_n1, invcnt_b1, pool_bn, x_tm, wih, whh, bx, bhn,
      w_out_p, b_out_p)


# ----------------------------------------------------------------------------
# Glue: embedding lookup + USE_RND random-record embedding + one fused kernel.
# ----------------------------------------------------------------------------
def mlpl_encoder_forward(params, input_var, input_lengths, rnd_key, *,
                         num_rnd_slots):
    B, R, S, _ = input_var.shape
    H = params["embedding"].shape[1]
    V = params["w_out"].shape[1]
    N = B * R

    inp_det = input_var[..., 0]            # (B, R, S) token ids
    inp_rnd = input_var[..., 1]            # (B, R, S) random-slot ids

    embedding_det = params["embedding"][inp_det]            # (B, R, S, H)

    # USE_RND branch.  torch.normal(0, ones) is runtime randomness; drawn
    # deterministically from a JAX key.  num_rnd_slots is a STATIC capacity
    # (>= max rnd id + 1) so the whole forward is jit-able — no host sync.
    rnd_mat = jax.random.normal(rnd_key, (B, num_rnd_slots, H), jnp.float32)
    rnd_mat = rnd_mat.at[:, 0, :].set(0.0)
    rnd_mat = rnd_mat * params["variances"][None, None, :]
    embedding_rnd = rnd_mat[jnp.arange(B)[:, None, None], inp_rnd, :]  # (B,R,S,H)

    # input_dropout_p defaults to 0 -> identity (inference), skipped.
    total = (embedding_det + embedding_rnd).reshape(N, S, H)            # (N,S,H)
    # Time-major flatten so each timestep reads a contiguous slice of the
    # hoisted gx buffer; bf16 cast here halves the HBM->VMEM bytes of the
    # only tensor that scales with S*N*H.
    x_tm = (jnp.transpose(total, (1, 0, 2))
            .reshape(S * N, H).astype(jnp.bfloat16))

    lengths_n1 = input_lengths.reshape(N, 1).astype(jnp.int32)
    counts = jnp.sum(input_lengths > 0, axis=1).astype(jnp.float32).reshape(B, 1)
    # Guard against all-zero-length batch rows (PyTorch would emit inf/nan).
    counts = jnp.maximum(counts, 1.0)
    inv_counts = 1.0 / counts              # exact, computed outside the kernel

    # 0/1 record->batch pooling matrix (exact in bf16).
    rec_batch = jnp.arange(N) // R
    pool = (rec_batch[None, :] == jnp.arange(B)[:, None]).astype(jnp.bfloat16)

    # Lane-packed gate layout [r|z|n]: single (H, 3H) matrices for the MXU.
    wih = params["w_ih"].astype(jnp.bfloat16)               # (H, 3H)
    whh = params["w_hh"].astype(jnp.bfloat16)               # (H, 3H)
    b_ih = params["b_ih"].reshape(1, 3 * H)
    b_hh = params["b_hh"].reshape(1, 3 * H)
    # Fold b_hr, b_hz into the hoisted input projection; only b_hn must stay
    # inside the recurrence (it is gated by r).
    bx = b_ih + jnp.concatenate(
        [b_hh[:, :2 * H], jnp.zeros((1, H), jnp.float32)], axis=1)
    bhn = b_hh[:, 2 * H:]

    # Pad the output vocab to a lane-dense multiple of 128 (unmasked vst in
    # the kernel); sliced back below.  Padded columns are exactly zero.
    Vp = ((V + 127) // 128) * 128
    w_out_p = jnp.zeros((H, Vp), jnp.float32).at[:, :V].set(params["w_out"])
    w_out_p = w_out_p.astype(jnp.bfloat16)
    b_out_p = jnp.zeros((1, Vp), jnp.float32).at[:, :V].set(params["b_out"])

    logits_p = mlpl_fused_call(x_tm, lengths_n1, inv_counts, pool,
                               wih, whh, bx, bhn, w_out_p, b_out_p)
    return logits_p[:, :V], total, counts


# ----------------------------------------------------------------------------
# Pure-JAX reference (sanity check of the Pallas kernel).
# ----------------------------------------------------------------------------
def reference_forward(params, total_nsh, lengths_n, counts_b1):
    N, S, H = total_nsh.shape
    B = counts_b1.shape[0]
    R = N // B

    def cell(h, inputs):
        x_t, t = inputs
        gx = x_t @ params["w_ih"] + params["b_ih"][0]
        gh = h @ params["w_hh"] + params["b_hh"][0]
        r = jax.nn.sigmoid(gx[:, :H] + gh[:, :H])
        z = jax.nn.sigmoid(gx[:, H:2 * H] + gh[:, H:2 * H])
        n = jnp.tanh(gx[:, 2 * H:] + r * gh[:, 2 * H:])
        h_new = (1 - z) * n + z * h
        h = jnp.where((t < lengths_n)[:, None], h_new, h)
        return h, None

    h0 = jnp.zeros((N, H), jnp.float32)
    xs = (jnp.transpose(total_nsh, (1, 0, 2)).astype(jnp.float32),
          jnp.arange(S))
    h, _ = lax.scan(cell, h0, xs)
    rec = jnp.sum(h.reshape(B, R, H), axis=1) / counts_b1
    return rec @ params["w_out"] + params["b_out"][0]


if __name__ == "__main__":
    # Small shapes consistent with the module's forward.
    B, R, S = 2, 4, 8          # batch, records per batch, seq_len
    H = 32                     # hidden_size
    INP_VOCAB, OUT_VOCAB = 20, 16
    NUM_RND_SLOTS = 6          # static capacity for rnd ids (>= max id + 1)

    key = jax.random.PRNGKey(0)
    ks = jax.random.split(key, 12)
    scale = 1.0 / math.sqrt(H)
    params = {
        "embedding": jax.random.normal(ks[0], (INP_VOCAB, H), jnp.float32) * 0.1,
        "variances": jax.random.normal(ks[1], (H,), jnp.float32) * 0.1,
        "w_ih": jax.random.normal(ks[2], (H, 3 * H), jnp.float32) * scale,
        "w_hh": jax.random.normal(ks[3], (H, 3 * H), jnp.float32) * scale,
        "b_ih": (jax.random.normal(ks[4], (3 * H,), jnp.float32) * scale
                 ).reshape(1, 3 * H),
        "b_hh": (jax.random.normal(ks[5], (3 * H,), jnp.float32) * scale
                 ).reshape(1, 3 * H),
        "w_out": jax.random.normal(ks[6], (H, OUT_VOCAB), jnp.float32) * 0.1,
        "b_out": (jax.random.normal(ks[7], (OUT_VOCAB,), jnp.float32) * 0.1
                  ).reshape(1, OUT_VOCAB),
    }

    tok = jax.random.randint(ks[8], (B, R, S), 0, INP_VOCAB, dtype=jnp.int32)
    rnd = jax.random.randint(ks[9], (B, R, S), 0, NUM_RND_SLOTS, dtype=jnp.int32)
    input_var = jnp.stack([tok, rnd], axis=-1)             # (B, R, S, 2)
    input_lengths = jnp.array([[8, 5, 0, 3],
                               [2, 8, 7, 0]], dtype=jnp.int32)  # (B, R)

    fwd = jax.jit(mlpl_encoder_forward, static_argnames=("num_rnd_slots",))
    logits, total, counts = fwd(params, input_var, input_lengths, ks[10],
                                num_rnd_slots=NUM_RND_SLOTS)
    logits = jax.block_until_ready(logits)

    ref = reference_forward(params, total, input_lengths.reshape(-1), counts)
    ref = jax.block_until_ready(ref)

    assert logits.shape == (B, OUT_VOCAB)
    np.testing.assert_allclose(np.asarray(logits), np.asarray(ref),
                               rtol=5e-2, atol=5e-2)
    print("KERNEL_OK")
</pallas_src>

<mosaic_0001>
module attributes {stable_mosaic.version = 11 : i64} {
  func.func @mlpl_fused_kernel(%arg0: i32, %arg1: memref<8x1xi32, #tpu.memory_space<vmem>>, %arg2: memref<2x1xf32, #tpu.memory_space<vmem>>, %arg3: memref<2x8xbf16, #tpu.memory_space<vmem>>, %arg4: memref<64x32xbf16, #tpu.memory_space<vmem>>, %arg5: memref<32x96xbf16, #tpu.memory_space<vmem>>, %arg6: memref<32x96xbf16, #tpu.memory_space<vmem>>, %arg7: memref<1x96xf32, #tpu.memory_space<vmem>>, %arg8: memref<1x32xf32, #tpu.memory_space<vmem>>, %arg9: memref<32x128xbf16, #tpu.memory_space<vmem>>, %arg10: memref<1x128xf32, #tpu.memory_space<vmem>>, %arg11: memref<2x128xf32, #tpu.memory_space<vmem>>) attributes {dimension_semantics = [#tpu.dimension_semantics<arbitrary>], iteration_bounds = array<i64: 1>, scalar_prefetch = 0 : i64, scratch_operands = 0 : i64, tpu.core_type = #tpu.core_type<tc>, window_params = [{pipeline_mode = #tpu.pipeline_mode<synchronous>, transform_indices = @transform_0, window_bounds = array<i64: 8, 1>}, {pipeline_mode = #tpu.pipeline_mode<synchronous>, transform_indices = @transform_1, window_bounds = array<i64: 2, 1>}, {pipeline_mode = #tpu.pipeline_mode<synchronous>, transform_indices = @transform_2, window_bounds = array<i64: 2, 8>}, {pipeline_mode = #tpu.pipeline_mode<synchronous>, transform_indices = @transform_3, window_bounds = array<i64: 64, 32>}, {pipeline_mode = #tpu.pipeline_mode<synchronous>, transform_indices = @transform_4, window_bounds = array<i64: 32, 96>}, {pipeline_mode = #tpu.pipeline_mode<synchronous>, transform_indices = @transform_5, window_bounds = array<i64: 32, 96>}, {pipeline_mode = #tpu.pipeline_mode<synchronous>, transform_indices = @transform_6, window_bounds = array<i64: 1, 96>}, {pipeline_mode = #tpu.pipeline_mode<synchronous>, transform_indices = @transform_7, window_bounds = array<i64: 1, 32>}, {pipeline_mode = #tpu.pipeline_mode<synchronous>, transform_indices = @transform_8, window_bounds = array<i64: 32, 128>}, {pipeline_mode = #tpu.pipeline_mode<synchronous>, transform_indices = @transform_9, window_bounds = array<i64: 1, 128>}, {pipeline_mode = #tpu.pipeline_mode<synchronous>, transform_indices = @transform_10, window_bounds = array<i64: 2, 128>}]} {
    %c0 = arith.constant 0 : index
    %c0_0 = arith.constant 0 : index
    %0 = vector.load %arg6[%c0, %c0_0] : memref<32x96xbf16, #tpu.memory_space<vmem>>, vector<32x96xbf16>
    %c0_1 = arith.constant 0 : index
    %c0_2 = arith.constant 0 : index
    %1 = vector.load %arg8[%c0_1, %c0_2] : memref<1x32xf32, #tpu.memory_space<vmem>>, vector<1x32xf32>
    %c0_3 = arith.constant 0 : index
    %c0_4 = arith.constant 0 : index
    %2 = vector.load %arg4[%c0_3, %c0_4] : memref<64x32xbf16, #tpu.memory_space<vmem>>, vector<64x32xbf16>
    %c0_5 = arith.constant 0 : index
    %c0_6 = arith.constant 0 : index
    %3 = vector.load %arg5[%c0_5, %c0_6] : memref<32x96xbf16, #tpu.memory_space<vmem>>, vector<32x96xbf16>
    %cst = arith.constant dense<0.000000e+00> : vector<64x96xf32>
    %4 = tpu.matmul %2, %3, %cst {dimension_numbers = #tpu.dot_dimension_numbers<[1], [0], [0], [1], [0, 0, 1, 1], [], []>} : vector<64x32xbf16>, vector<32x96xbf16>, vector<64x96xf32> -> vector<64x96xf32>
    %c0_7 = arith.constant 0 : index
    %c0_8 = arith.constant 0 : index
    %5 = vector.load %arg7[%c0_7, %c0_8] : memref<1x96xf32, #tpu.memory_space<vmem>>, vector<1x96xf32>
    %6 = vector.broadcast %5 : vector<1x96xf32> to vector<64x96xf32>
    %7 = arith.addf %4, %6 : vector<64x96xf32>
    %c0_9 = arith.constant 0 : index
    %c0_10 = arith.constant 0 : index
    %8 = vector.load %arg1[%c0_9, %c0_10] : memref<8x1xi32, #tpu.memory_space<vmem>>, vector<8x1xi32>
    %cst_11 = arith.constant 0.000000e+00 : f32
    %9 = vector.broadcast %cst_11 : f32 to vector<8x32xf32>
    %10 = vector.extract_strided_slice %7 {offsets = [0, 0], sizes = [8, 96], strides = [1, 1]} : vector<64x96xf32> to vector<8x96xf32>
    %11 = arith.truncf %9 : vector<8x32xf32> to vector<8x32xbf16>
    %cst_12 = arith.constant dense<0.000000e+00> : vector<8x96xf32>
    %12 = tpu.matmul %11, %0, %cst_12 {dimension_numbers = #tpu.dot_dimension_numbers<[1], [0], [0], [1], [0, 0, 1, 1], [], []>} : vector<8x32xbf16>, vector<32x96xbf16>, vector<8x96xf32> -> vector<8x96xf32>
    %13 = vector.extract_strided_slice %10 {offsets = [0, 0], sizes = [8, 64], strides = [1, 1]} : vector<8x96xf32> to vector<8x64xf32>
    %14 = vector.extract_strided_slice %12 {offsets = [0, 0], sizes = [8, 64], strides = [1, 1]} : vector<8x96xf32> to vector<8x64xf32>
    %15 = arith.addf %13, %14 : vector<8x64xf32>
    %16 = arith.negf %15 : vector<8x64xf32>
    %17 = math.exp %16 : vector<8x64xf32>
    %cst_13 = arith.constant 1.000000e+00 : f32
    %18 = vector.broadcast %cst_13 : f32 to vector<8x64xf32>
    %19 = arith.addf %18, %17 : vector<8x64xf32>
    %20 = arith.divf %18, %19 : vector<8x64xf32>
    %21 = vector.extract_strided_slice %20 {offsets = [0, 0], sizes = [8, 32], strides = [1, 1]} : vector<8x64xf32> to vector<8x32xf32>
    %22 = vector.extract_strided_slice %20 {offsets = [0, 32], sizes = [8, 32], strides = [1, 1]} : vector<8x64xf32> to vector<8x32xf32>
    %23 = vector.extract_strided_slice %10 {offsets = [0, 64], sizes = [8, 32], strides = [1, 1]} : vector<8x96xf32> to vector<8x32xf32>
    %24 = vector.extract_strided_slice %12 {offsets = [0, 64], sizes = [8, 32], strides = [1, 1]} : vector<8x96xf32> to vector<8x32xf32>
    %25 = vector.broadcast %1 : vector<1x32xf32> to vector<8x32xf32>
    %26 = arith.addf %24, %25 : vector<8x32xf32>
    %27 = arith.mulf %21, %26 : vector<8x32xf32>
    %28 = arith.addf %23, %27 : vector<8x32xf32>
    %29 = math.tanh %28 : vector<8x32xf32>
    %cst_14 = arith.constant 1.000000e+00 : f32
    %30 = vector.broadcast %cst_14 : f32 to vector<8x32xf32>
    %31 = arith.subf %30, %22 : vector<8x32xf32>
    %32 = arith.mulf %31, %29 : vector<8x32xf32>
    %33 = arith.mulf %22, %9 : vector<8x32xf32>
    %34 = arith.addf %32, %33 : vector<8x32xf32>
    %c0_i32 = arith.constant 0 : i32
    %35 = vector.broadcast %c0_i32 : i32 to vector<8x1xi32>
    %36 = arith.cmpi sgt, %8, %35 : vector<8x1xi32>
    %37 = vector.shape_cast %36 : vector<8x1xi1> to vector<8x1xi1>
    %38 = vector.broadcast %37 : vector<8x1xi1> to vector<8x32xi1>
    %39 = arith.select %38, %34, %9 : vector<8x32xi1>, vector<8x32xf32>
    %40 = vector.extract_strided_slice %7 {offsets = [8, 0], sizes = [8, 96], strides = [1, 1]} : vector<64x96xf32> to vector<8x96xf32>
    %41 = arith.truncf %39 : vector<8x32xf32> to vector<8x32xbf16>
    %cst_15 = arith.constant dense<0.000000e+00> : vector<8x96xf32>
    %42 = tpu.matmul %41, %0, %cst_15 {dimension_numbers = #tpu.dot_dimension_numbers<[1], [0], [0], [1], [0, 0, 1, 1], [], []>} : vector<8x32xbf16>, vector<32x96xbf16>, vector<8x96xf32> -> vector<8x96xf32>
    %43 = vector.extract_strided_slice %40 {offsets = [0, 0], sizes = [8, 64], strides = [1, 1]} : vector<8x96xf32> to vector<8x64xf32>
    %44 = vector.extract_strided_slice %42 {offsets = [0, 0], sizes = [8, 64], strides = [1, 1]} : vector<8x96xf32> to vector<8x64xf32>
    %45 = arith.addf %43, %44 : vector<8x64xf32>
    %46 = arith.negf %45 : vector<8x64xf32>
    %47 = math.exp %46 : vector<8x64xf32>
    %cst_16 = arith.constant 1.000000e+00 : f32
    %48 = vector.broadcast %cst_16 : f32 to vector<8x64xf32>
    %49 = arith.addf %48, %47 : vector<8x64xf32>
    %50 = arith.divf %48, %49 : vector<8x64xf32>
    %51 = vector.extract_strided_slice %50 {offsets = [0, 0], sizes = [8, 32], strides = [1, 1]} : vector<8x64xf32> to vector<8x32xf32>
    %52 = vector.extract_strided_slice %50 {offsets = [0, 32], sizes = [8, 32], strides = [1, 1]} : vector<8x64xf32> to vector<8x32xf32>
    %53 = vector.extract_strided_slice %40 {offsets = [0, 64], sizes = [8, 32], strides = [1, 1]} : vector<8x96xf32> to vector<8x32xf32>
    %54 = vector.extract_strided_slice %42 {offsets = [0, 64], sizes = [8, 32], strides = [1, 1]} : vector<8x96xf32> to vector<8x32xf32>
    %55 = vector.broadcast %1 : vector<1x32xf32> to vector<8x32xf32>
    %56 = arith.addf %54, %55 : vector<8x32xf32>
    %57 = arith.mulf %51, %56 : vector<8x32xf32>
    %58 = arith.addf %53, %57 : vector<8x32xf32>
    %59 = math.tanh %58 : vector<8x32xf32>
    %cst_17 = arith.constant 1.000000e+00 : f32
    %60 = vector.broadcast %cst_17 : f32 to vector<8x32xf32>
    %61 = arith.subf %60, %52 : vector<8x32xf32>
    %62 = arith.mulf %61, %59 : vector<8x32xf32>
    %63 = arith.mulf %52, %39 : vector<8x32xf32>
    %64 = arith.addf %62, %63 : vector<8x32xf32>
    %c1_i32 = arith.constant 1 : i32
    %65 = vector.broadcast %c1_i32 : i32 to vector<8x1xi32>
    %66 = arith.cmpi sgt, %8, %65 : vector<8x1xi32>
    %67 = vector.shape_cast %66 : vector<8x1xi1> to vector<8x1xi1>
    %68 = vector.broadcast %67 : vector<8x1xi1> to vector<8x32xi1>
    %69 = arith.select %68, %64, %39 : vector<8x32xi1>, vector<8x32xf32>
    %70 = vector.extract_strided_slice %7 {offsets = [16, 0], sizes = [8, 96], strides = [1, 1]} : vector<64x96xf32> to vector<8x96xf32>
    %71 = arith.truncf %69 : vector<8x32xf32> to vector<8x32xbf16>
    %cst_18 = arith.constant dense<0.000000e+00> : vector<8x96xf32>
    %72 = tpu.matmul %71, %0, %cst_18 {dimension_numbers = #tpu.dot_dimension_numbers<[1], [0], [0], [1], [0, 0, 1, 1], [], []>} : vector<8x32xbf16>, vector<32x96xbf16>, vector<8x96xf32> -> vector<8x96xf32>
    %73 = vector.extract_strided_slice %70 {offsets = [0, 0], sizes = [8, 64], strides = [1, 1]} : vector<8x96xf32> to vector<8x64xf32>
    %74 = vector.extract_strided_slice %72 {offsets = [0, 0], sizes = [8, 64], strides = [1, 1]} : vector<8x96xf32> to vector<8x64xf32>
    %75 = arith.addf %73, %74 : vector<8x64xf32>
    %76 = arith.negf %75 : vector<8x64xf32>
    %77 = math.exp %76 : vector<8x64xf32>
    %cst_19 = arith.constant 1.000000e+00 : f32
    %78 = vector.broadcast %cst_19 : f32 to vector<8x64xf32>
    %79 = arith.addf %78, %77 : vector<8x64xf32>
    %80 = arith.divf %78, %79 : vector<8x64xf32>
    %81 = vector.extract_strided_slice %80 {offsets = [0, 0], sizes = [8, 32], strides = [1, 1]} : vector<8x64xf32> to vector<8x32xf32>
    %82 = vector.extract_strided_slice %80 {offsets = [0, 32], sizes = [8, 32], strides = [1, 1]} : vector<8x64xf32> to vector<8x32xf32>
    %83 = vector.extract_strided_slice %70 {offsets = [0, 64], sizes = [8, 32], strides = [1, 1]} : vector<8x96xf32> to vector<8x32xf32>
    %84 = vector.extract_strided_slice %72 {offsets = [0, 64], sizes = [8, 32], strides = [1, 1]} : vector<8x96xf32> to vector<8x32xf32>
    %85 = vector.broadcast %1 : vector<1x32xf32> to vector<8x32xf32>
    %86 = arith.addf %84, %85 : vector<8x32xf32>
    %87 = arith.mulf %81, %86 : vector<8x32xf32>
    %88 = arith.addf %83, %87 : vector<8x32xf32>
    %89 = math.tanh %88 : vector<8x32xf32>
    %cst_20 = arith.constant 1.000000e+00 : f32
    %90 = vector.broadcast %cst_20 : f32 to vector<8x32xf32>
    %91 = arith.subf %90, %82 : vector<8x32xf32>
    %92 = arith.mulf %91, %89 : vector<8x32xf32>
    %93 = arith.mulf %82, %69 : vector<8x32xf32>
    %94 = arith.addf %92, %93 : vector<8x32xf32>
    %c2_i32 = arith.constant 2 : i32
    %95 = vector.broadcast %c2_i32 : i32 to vector<8x1xi32>
    %96 = arith.cmpi sgt, %8, %95 : vector<8x1xi32>
    %97 = vector.shape_cast %96 : vector<8x1xi1> to vector<8x1xi1>
    %98 = vector.broadcast %97 : vector<8x1xi1> to vector<8x32xi1>
    %99 = arith.select %98, %94, %69 : vector<8x32xi1>, vector<8x32xf32>
    %100 = vector.extract_strided_slice %7 {offsets = [24, 0], sizes = [8, 96], strides = [1, 1]} : vector<64x96xf32> to vector<8x96xf32>
    %101 = arith.truncf %99 : vector<8x32xf32> to vector<8x32xbf16>
    %cst_21 = arith.constant dense<0.000000e+00> : vector<8x96xf32>
    %102 = tpu.matmul %101, %0, %cst_21 {dimension_numbers = #tpu.dot_dimension_numbers<[1], [0], [0], [1], [0, 0, 1, 1], [], []>} : vector<8x32xbf16>, vector<32x96xbf16>, vector<8x96xf32> -> vector<8x96xf32>
    %103 = vector.extract_strided_slice %100 {offsets = [0, 0], sizes = [8, 64], strides = [1, 1]} : vector<8x96xf32> to vector<8x64xf32>
    %104 = vector.extract_strided_slice %102 {offsets = [0, 0], sizes = [8, 64], strides = [1, 1]} : vector<8x96xf32> to vector<8x64xf32>
    %105 = arith.addf %103, %104 : vector<8x64xf32>
    %106 = arith.negf %105 : vector<8x64xf32>
    %107 = math.exp %106 : vector<8x64xf32>
    %cst_22 = arith.constant 1.000000e+00 : f32
    %108 = vector.broadcast %cst_22 : f32 to vector<8x64xf32>
    %109 = arith.addf %108, %107 : vector<8x64xf32>
    %110 = arith.divf %108, %109 : vector<8x64xf32>
    %111 = vector.extract_strided_slice %110 {offsets = [0, 0], sizes = [8, 32], strides = [1, 1]} : vector<8x64xf32> to vector<8x32xf32>
    %112 = vector.extract_strided_slice %110 {offsets = [0, 32], sizes = [8, 32], strides = [1, 1]} : vector<8x64xf32> to vector<8x32xf32>
    %113 = vector.extract_strided_slice %100 {offsets = [0, 64], sizes = [8, 32], strides = [1, 1]} : vector<8x96xf32> to vector<8x32xf32>
    %114 = vector.extract_strided_slice %102 {offsets = [0, 64], sizes = [8, 32], strides = [1, 1]} : vector<8x96xf32> to vector<8x32xf32>
    %115 = vector.broadcast %1 : vector<1x32xf32> to vector<8x32xf32>
    %116 = arith.addf %114, %115 : vector<8x32xf32>
    %117 = arith.mulf %111, %116 : vector<8x32xf32>
    %118 = arith.addf %113, %117 : vector<8x32xf32>
    %119 = math.tanh %118 : vector<8x32xf32>
    %cst_23 = arith.constant 1.000000e+00 : f32
    %120 = vector.broadcast %cst_23 : f32 to vector<8x32xf32>
    %121 = arith.subf %120, %112 : vector<8x32xf32>
    %122 = arith.mulf %121, %119 : vector<8x32xf32>
    %123 = arith.mulf %112, %99 : vector<8x32xf32>
    %124 = arith.addf %122, %123 : vector<8x32xf32>
    %c3_i32 = arith.constant 3 : i32
    %125 = vector.broadcast %c3_i32 : i32 to vector<8x1xi32>
    %126 = arith.cmpi sgt, %8, %125 : vector<8x1xi32>
    %127 = vector.shape_cast %126 : vector<8x1xi1> to vector<8x1xi1>
    %128 = vector.broadcast %127 : vector<8x1xi1> to vector<8x32xi1>
    %129 = arith.select %128, %124, %99 : vector<8x32xi1>, vector<8x32xf32>
    %130 = vector.extract_strided_slice %7 {offsets = [32, 0], sizes = [8, 96], strides = [1, 1]} : vector<64x96xf32> to vector<8x96xf32>
    %131 = arith.truncf %129 : vector<8x32xf32> to vector<8x32xbf16>
    %cst_24 = arith.constant dense<0.000000e+00> : vector<8x96xf32>
    %132 = tpu.matmul %131, %0, %cst_24 {dimension_numbers = #tpu.dot_dimension_numbers<[1], [0], [0], [1], [0, 0, 1, 1], [], []>} : vector<8x32xbf16>, vector<32x96xbf16>, vector<8x96xf32> -> vector<8x96xf32>
    %133 = vector.extract_strided_slice %130 {offsets = [0, 0], sizes = [8, 64], strides = [1, 1]} : vector<8x96xf32> to vector<8x64xf32>
    %134 = vector.extract_strided_slice %132 {offsets = [0, 0], sizes = [8, 64], strides = [1, 1]} : vector<8x96xf32> to vector<8x64xf32>
    %135 = arith.addf %133, %134 : vector<8x64xf32>
    %136 = arith.negf %135 : vector<8x64xf32>
    %137 = math.exp %136 : vector<8x64xf32>
    %cst_25 = arith.constant 1.000000e+00 : f32
    %138 = vector.broadcast %cst_25 : f32 to vector<8x64xf32>
    %139 = arith.addf %138, %137 : vector<8x64xf32>
    %140 = arith.divf %138, %139 : vector<8x64xf32>
    %141 = vector.extract_strided_slice %140 {offsets = [0, 0], sizes = [8, 32], strides = [1, 1]} : vector<8x64xf32> to vector<8x32xf32>
    %142 = vector.extract_strided_slice %140 {offsets = [0, 32], sizes = [8, 32], strides = [1, 1]} : vector<8x64xf32> to vector<8x32xf32>
    %143 = vector.extract_strided_slice %130 {offsets = [0, 64], sizes = [8, 32], strides = [1, 1]} : vector<8x96xf32> to vector<8x32xf32>
    %144 = vector.extract_strided_slice %132 {offsets = [0, 64], sizes = [8, 32], strides = [1, 1]} : vector<8x96xf32> to vector<8x32xf32>
    %145 = vector.broadcast %1 : vector<1x32xf32> to vector<8x32xf32>
    %146 = arith.addf %144, %145 : vector<8x32xf32>
    %147 = arith.mulf %141, %146 : vector<8x32xf32>
    %148 = arith.addf %143, %147 : vector<8x32xf32>
    %149 = math.tanh %148 : vector<8x32xf32>
    %cst_26 = arith.constant 1.000000e+00 : f32
    %150 = vector.broadcast %cst_26 : f32 to vector<8x32xf32>
    %151 = arith.subf %150, %142 : vector<8x32xf32>
    %152 = arith.mulf %151, %149 : vector<8x32xf32>
    %153 = arith.mulf %142, %129 : vector<8x32xf32>
    %154 = arith.addf %152, %153 : vector<8x32xf32>
    %c4_i32 = arith.constant 4 : i32
    %155 = vector.broadcast %c4_i32 : i32 to vector<8x1xi32>
    %156 = arith.cmpi sgt, %8, %155 : vector<8x1xi32>
    %157 = vector.shape_cast %156 : vector<8x1xi1> to vector<8x1xi1>
    %158 = vector.broadcast %157 : vector<8x1xi1> to vector<8x32xi1>
    %159 = arith.select %158, %154, %129 : vector<8x32xi1>, vector<8x32xf32>
    %160 = vector.extract_strided_slice %7 {offsets = [40, 0], sizes = [8, 96], strides = [1, 1]} : vector<64x96xf32> to vector<8x96xf32>
    %161 = arith.truncf %159 : vector<8x32xf32> to vector<8x32xbf16>
    %cst_27 = arith.constant dense<0.000000e+00> : vector<8x96xf32>
    %162 = tpu.matmul %161, %0, %cst_27 {dimension_numbers = #tpu.dot_dimension_numbers<[1], [0], [0], [1], [0, 0, 1, 1], [], []>} : vector<8x32xbf16>, vector<32x96xbf16>, vector<8x96xf32> -> vector<8x96xf32>
    %163 = vector.extract_strided_slice %160 {offsets = [0, 0], sizes = [8, 64], strides = [1, 1]} : vector<8x96xf32> to vector<8x64xf32>
    %164 = vector.extract_strided_slice %162 {offsets = [0, 0], sizes = [8, 64], strides = [1, 1]} : vector<8x96xf32> to vector<8x64xf32>
    %165 = arith.addf %163, %164 : vector<8x64xf32>
    %166 = arith.negf %165 : vector<8x64xf32>
    %167 = math.exp %166 : vector<8x64xf32>
    %cst_28 = arith.constant 1.000000e+00 : f32
    %168 = vector.broadcast %cst_28 : f32 to vector<8x64xf32>
    %169 = arith.addf %168, %167 : vector<8x64xf32>
    %170 = arith.divf %168, %169 : vector<8x64xf32>
    %171 = vector.extract_strided_slice %170 {offsets = [0, 0], sizes = [8, 32], strides = [1, 1]} : vector<8x64xf32> to vector<8x32xf32>
    %172 = vector.extract_strided_slice %170 {offsets = [0, 32], sizes = [8, 32], strides = [1, 1]} : vector<8x64xf32> to vector<8x32xf32>
    %173 = vector.extract_strided_slice %160 {offsets = [0, 64], sizes = [8, 32], strides = [1, 1]} : vector<8x96xf32> to vector<8x32xf32>
    %174 = vector.extract_strided_slice %162 {offsets = [0, 64], sizes = [8, 32], strides = [1, 1]} : vector<8x96xf32> to vector<8x32xf32>
    %175 = vector.broadcast %1 : vector<1x32xf32> to vector<8x32xf32>
    %176 = arith.addf %174, %175 : vector<8x32xf32>
    %177 = arith.mulf %171, %176 : vector<8x32xf32>
    %178 = arith.addf %173, %177 : vector<8x32xf32>
    %179 = math.tanh %178 : vector<8x32xf32>
    %cst_29 = arith.constant 1.000000e+00 : f32
    %180 = vector.broadcast %cst_29 : f32 to vector<8x32xf32>
    %181 = arith.subf %180, %172 : vector<8x32xf32>
    %182 = arith.mulf %181, %179 : vector<8x32xf32>
    %183 = arith.mulf %172, %159 : vector<8x32xf32>
    %184 = arith.addf %182, %183 : vector<8x32xf32>
    %c5_i32 = arith.constant 5 : i32
    %185 = vector.broadcast %c5_i32 : i32 to vector<8x1xi32>
    %186 = arith.cmpi sgt, %8, %185 : vector<8x1xi32>
    %187 = vector.shape_cast %186 : vector<8x1xi1> to vector<8x1xi1>
    %188 = vector.broadcast %187 : vector<8x1xi1> to vector<8x32xi1>
    %189 = arith.select %188, %184, %159 : vector<8x32xi1>, vector<8x32xf32>
    %190 = vector.extract_strided_slice %7 {offsets = [48, 0], sizes = [8, 96], strides = [1, 1]} : vector<64x96xf32> to vector<8x96xf32>
    %191 = arith.truncf %189 : vector<8x32xf32> to vector<8x32xbf16>
    %cst_30 = arith.constant dense<0.000000e+00> : vector<8x96xf32>
    %192 = tpu.matmul %191, %0, %cst_30 {dimension_numbers = #tpu.dot_dimension_numbers<[1], [0], [0], [1], [0, 0, 1, 1], [], []>} : vector<8x32xbf16>, vector<32x96xbf16>, vector<8x96xf32> -> vector<8x96xf32>
    %193 = vector.extract_strided_slice %190 {offsets = [0, 0], sizes = [8, 64], strides = [1, 1]} : vector<8x96xf32> to vector<8x64xf32>
    %194 = vector.extract_strided_slice %192 {offsets = [0, 0], sizes = [8, 64], strides = [1, 1]} : vector<8x96xf32> to vector<8x64xf32>
    %195 = arith.addf %193, %194 : vector<8x64xf32>
    %196 = arith.negf %195 : vector<8x64xf32>
    %197 = math.exp %196 : vector<8x64xf32>
    %cst_31 = arith.constant 1.000000e+00 : f32
    %198 = vector.broadcast %cst_31 : f32 to vector<8x64xf32>
    %199 = arith.addf %198, %197 : vector<8x64xf32>
    %200 = arith.divf %198, %199 : vector<8x64xf32>
    %201 = vector.extract_strided_slice %200 {offsets = [0, 0], sizes = [8, 32], strides = [1, 1]} : vector<8x64xf32> to vector<8x32xf32>
    %202 = vector.extract_strided_slice %200 {offsets = [0, 32], sizes = [8, 32], strides = [1, 1]} : vector<8x64xf32> to vector<8x32xf32>
    %203 = vector.extract_strided_slice %190 {offsets = [0, 64], sizes = [8, 32], strides = [1, 1]} : vector<8x96xf32> to vector<8x32xf32>
    %204 = vector.extract_strided_slice %192 {offsets = [0, 64], sizes = [8, 32], strides = [1, 1]} : vector<8x96xf32> to vector<8x32xf32>
    %205 = vector.broadcast %1 : vector<1x32xf32> to vector<8x32xf32>
    %206 = arith.addf %204, %205 : vector<8x32xf32>
    %207 = arith.mulf %201, %206 : vector<8x32xf32>
    %208 = arith.addf %203, %207 : vector<8x32xf32>
    %209 = math.tanh %208 : vector<8x32xf32>
    %cst_32 = arith.constant 1.000000e+00 : f32
    %210 = vector.broadcast %cst_32 : f32 to vector<8x32xf32>
    %211 = arith.subf %210, %202 : vector<8x32xf32>
    %212 = arith.mulf %211, %209 : vector<8x32xf32>
    %213 = arith.mulf %202, %189 : vector<8x32xf32>
    %214 = arith.addf %212, %213 : vector<8x32xf32>
    %c6_i32 = arith.constant 6 : i32
    %215 = vector.broadcast %c6_i32 : i32 to vector<8x1xi32>
    %216 = arith.cmpi sgt, %8, %215 : vector<8x1xi32>
    %217 = vector.shape_cast %216 : vector<8x1xi1> to vector<8x1xi1>
    %218 = vector.broadcast %217 : vector<8x1xi1> to vector<8x32xi1>
    %219 = arith.select %218, %214, %189 : vector<8x32xi1>, vector<8x32xf32>
    %220 = vector.extract_strided_slice %7 {offsets = [56, 0], sizes = [8, 96], strides = [1, 1]} : vector<64x96xf32> to vector<8x96xf32>
    %221 = arith.truncf %219 : vector<8x32xf32> to vector<8x32xbf16>
    %cst_33 = arith.constant dense<0.000000e+00> : vector<8x96xf32>
    %222 = tpu.matmul %221, %0, %cst_33 {dimension_numbers = #tpu.dot_dimension_numbers<[1], [0], [0], [1], [0, 0, 1, 1], [], []>} : vector<8x32xbf16>, vector<32x96xbf16>, vector<8x96xf32> -> vector<8x96xf32>
    %223 = vector.extract_strided_slice %220 {offsets = [0, 0], sizes = [8, 64], strides = [1, 1]} : vector<8x96xf32> to vector<8x64xf32>
    %224 = vector.extract_strided_slice %222 {offsets = [0, 0], sizes = [8, 64], strides = [1, 1]} : vector<8x96xf32> to vector<8x64xf32>
    %225 = arith.addf %223, %224 : vector<8x64xf32>
    %226 = arith.negf %225 : vector<8x64xf32>
    %227 = math.exp %226 : vector<8x64xf32>
    %cst_34 = arith.constant 1.000000e+00 : f32
    %228 = vector.broadcast %cst_34 : f32 to vector<8x64xf32>
    %229 = arith.addf %228, %227 : vector<8x64xf32>
    %230 = arith.divf %228, %229 : vector<8x64xf32>
    %231 = vector.extract_strided_slice %230 {offsets = [0, 0], sizes = [8, 32], strides = [1, 1]} : vector<8x64xf32> to vector<8x32xf32>
    %232 = vector.extract_strided_slice %230 {offsets = [0, 32], sizes = [8, 32], strides = [1, 1]} : vector<8x64xf32> to vector<8x32xf32>
    %233 = vector.extract_strided_slice %220 {offsets = [0, 64], sizes = [8, 32], strides = [1, 1]} : vector<8x96xf32> to vector<8x32xf32>
    %234 = vector.extract_strided_slice %222 {offsets = [0, 64], sizes = [8, 32], strides = [1, 1]} : vector<8x96xf32> to vector<8x32xf32>
    %235 = vector.broadcast %1 : vector<1x32xf32> to vector<8x32xf32>
    %236 = arith.addf %234, %235 : vector<8x32xf32>
    %237 = arith.mulf %231, %236 : vector<8x32xf32>
    %238 = arith.addf %233, %237 : vector<8x32xf32>
    %239 = math.tanh %238 : vector<8x32xf32>
    %cst_35 = arith.constant 1.000000e+00 : f32
    %240 = vector.broadcast %cst_35 : f32 to vector<8x32xf32>
    %241 = arith.subf %240, %232 : vector<8x32xf32>
    %242 = arith.mulf %241, %239 : vector<8x32xf32>
    %243 = arith.mulf %232, %219 : vector<8x32xf32>
    %244 = arith.addf %242, %243 : vector<8x32xf32>
    %c7_i32 = arith.constant 7 : i32
    %245 = vector.broadcast %c7_i32 : i32 to vector<8x1xi32>
    %246 = arith.cmpi sgt, %8, %245 : vector<8x1xi32>
    %247 = vector.shape_cast %246 : vector<8x1xi1> to vector<8x1xi1>
    %248 = vector.broadcast %247 : vector<8x1xi1> to vector<8x32xi1>
    %249 = arith.select %248, %244, %219 : vector<8x32xi1>, vector<8x32xf32>
    %c0_36 = arith.constant 0 : index
    %c0_37 = arith.constant 0 : index
    %250 = vector.load %arg3[%c0_36, %c0_37] : memref<2x8xbf16, #tpu.memory_space<vmem>>, vector<2x8xbf16>
    %251 = arith.truncf %249 : vector<8x32xf32> to vector<8x32xbf16>
    %cst_38 = arith.constant dense<0.000000e+00> : vector<2x32xf32>
    %252 = tpu.matmul %250, %251, %cst_38 {dimension_numbers = #tpu.dot_dimension_numbers<[1], [0], [0], [1], [0, 0, 1, 1], [], []>} : vector<2x8xbf16>, vector<8x32xbf16>, vector<2x32xf32> -> vector<2x32xf32>
    %253 = arith.truncf %252 : vector<2x32xf32> to vector<2x32xbf16>
    %c0_39 = arith.constant 0 : index
    %c0_40 = arith.constant 0 : index
    %254 = vector.load %arg9[%c0_39, %c0_40] : memref<32x128xbf16, #tpu.memory_space<vmem>>, vector<32x128xbf16>
    %cst_41 = arith.constant dense<0.000000e+00> : vector<2x128xf32>
    %255 = tpu.matmul %253, %254, %cst_41 {dimension_numbers = #tpu.dot_dimension_numbers<[1], [0], [0], [1], [0, 0, 1, 1], [], []>} : vector<2x32xbf16>, vector<32x128xbf16>, vector<2x128xf32> -> vector<2x128xf32>
    %c0_42 = arith.constant 0 : index
    %c0_43 = arith.constant 0 : index
    %256 = vector.load %arg2[%c0_42, %c0_43] : memref<2x1xf32, #tpu.memory_space<vmem>>, vector<2x1xf32>
    %257 = vector.broadcast %256 : vector<2x1xf32> to vector<2x128xf32>
    %258 = arith.mulf %255, %257 : vector<2x128xf32>
    %c0_44 = arith.constant 0 : index
    %c0_45 = arith.constant 0 : index
    %259 = vector.load %arg10[%c0_44, %c0_45] : memref<1x128xf32, #tpu.memory_space<vmem>>, vector<1x128xf32>
    %260 = vector.broadcast %259 : vector<1x128xf32> to vector<2x128xf32>
    %261 = arith.addf %258, %260 : vector<2x128xf32>
    %c0_46 = arith.constant 0 : index
    %c0_47 = arith.constant 0 : index
    %262 = vector.load %arg11[%c0_46, %c0_47] : memref<2x128xf32, #tpu.memory_space<vmem>>, vector<2x128xf32>
    tpu.vector_store %arg11[%c0_46, %c0_47], %261 {strides = array<i32>} : memref<2x128xf32, #tpu.memory_space<vmem>>, vector<2x128xf32>,
    return
  }
  func.func @transform_0(%arg0: i32) -> (i32, i32) {
    %c0_i32 = arith.constant 0 : i32
    %c0_i32_0 = arith.constant 0 : i32
    %c0_i32_1 = arith.constant 0 : i32
    return %c0_i32, %c0_i32_0 : i32, i32
  }
  func.func @transform_1(%arg0: i32) -> (i32, i32) {
    %c0_i32 = arith.constant 0 : i32
    %c0_i32_0 = arith.constant 0 : i32
    %c0_i32_1 = arith.constant 0 : i32
    return %c0_i32, %c0_i32_0 : i32, i32
  }
  func.func @transform_2(%arg0: i32) -> (i32, i32) {
    %c0_i32 = arith.constant 0 : i32
    %c0_i32_0 = arith.constant 0 : i32
    %c0_i32_1 = arith.constant 0 : i32
    return %c0_i32, %c0_i32_0 : i32, i32
  }
  func.func @transform_3(%arg0: i32) -> (i32, i32) {
    %c0_i32 = arith.constant 0 : i32
    %c0_i32_0 = arith.constant 0 : i32
    %c0_i32_1 = arith.constant 0 : i32
    return %c0_i32, %c0_i32_0 : i32, i32
  }
  func.func @transform_4(%arg0: i32) -> (i32, i32) {
    %c0_i32 = arith.constant 0 : i32
    %c0_i32_0 = arith.constant 0 : i32
    %c0_i32_1 = arith.constant 0 : i32
    return %c0_i32, %c0_i32_0 : i32, i32
  }
  func.func @transform_5(%arg0: i32) -> (i32, i32) {
    %c0_i32 = arith.constant 0 : i32
    %c0_i32_0 = arith.constant 0 : i32
    %c0_i32_1 = arith.constant 0 : i32
    return %c0_i32, %c0_i32_0 : i32, i32
  }
  func.func @transform_6(%arg0: i32) -> (i32, i32) {
    %c0_i32 = arith.constant 0 : i32
    %c0_i32_0 = arith.constant 0 : i32
    %c0_i32_1 = arith.constant 0 : i32
    return %c0_i32, %c0_i32_0 : i32, i32
  }
  func.func @transform_7(%arg0: i32) -> (i32, i32) {
    %c0_i32 = arith.constant 0 : i32
    %c0_i32_0 = arith.constant 0 : i32
    %c0_i32_1 = arith.constant 0 : i32
    return %c0_i32, %c0_i32_0 : i32, i32
  }
  func.func @transform_8(%arg0: i32) -> (i32, i32) {
    %c0_i32 = arith.constant 0 : i32
    %c0_i32_0 = arith.constant 0 : i32
    %c0_i32_1 = arith.constant 0 : i32
    return %c0_i32, %c0_i32_0 : i32, i32
  }
  func.func @transform_9(%arg0: i32) -> (i32, i32) {
    %c0_i32 = arith.constant 0 : i32
    %c0_i32_0 = arith.constant 0 : i32
    %c0_i32_1 = arith.constant 0 : i32
    return %c0_i32, %c0_i32_0 : i32, i32
  }
  func.func @transform_10(%arg0: i32) -> (i32, i32) {
    %c0_i32 = arith.constant 0 : i32
    %c0_i32_0 = arith.constant 0 : i32
    %c0_i32_1 = arith.constant 0 : i32
    return %c0_i32, %c0_i32_0 : i32, i32
  }
}

</mosaic_0001>

<llo_original>
// kernel: mlpl_encoder_forward.1
$region0: #{mlpl_encoder_forward.1}
  #allocation0 [shape = 'u32[]', space=smem, size = 0x4, offset = 0x4, fixed_abs, tag = 'smem constant byte address 0x4 - core index']
  #allocation1 [shape = 'u32[144,128]{1,0:T(1,128)}', space=vmem, size = 0x12000, scoped, tag = 'internal scratch']
  %s0 = inlined_call_operand.vmem [shape: s32[8,1], index: 0, kind: input, shape index: {}]
  %s1 = inlined_call_operand.vmem [shape: f32[2,1], index: 1, kind: input, shape index: {}]
  %s2 = inlined_call_operand.vmem [shape: bf16[2,8], index: 2, kind: input, shape index: {}]
  %s3 = inlined_call_operand.vmem [shape: bf16[64,32], index: 3, kind: input, shape index: {}]
  %s4 = inlined_call_operand.vmem [shape: bf16[32,96], index: 4, kind: input, shape index: {}]
  %s5 = inlined_call_operand.vmem [shape: bf16[32,96], index: 5, kind: input, shape index: {}]
  %s6 = inlined_call_operand.vmem [shape: f32[1,96], index: 6, kind: input, shape index: {}]
  %s7 = inlined_call_operand.vmem [shape: f32[1,32], index: 7, kind: input, shape index: {}]
  %s8 = inlined_call_operand.vmem [shape: bf16[32,128], index: 8, kind: input, shape index: {}]
  %s9 = inlined_call_operand.vmem [shape: f32[1,128], index: 9, kind: input, shape index: {}]
  %s10 = inlined_call_operand.hbm [shape: f32[2,128], index: 10, kind: output, shape index: {}]
  %s11 = sld [smem:[#allocation0]]
  $region50: #{mlpl_encoder_forward.1} parent=0
    _
  %s13 = ssub.s32 1, %s11
  %s14 = scalar_select 0, %s13, %s11
  $region1: #{mlpl_encoder_forward.1} parent=0
    #allocation2 [shape = 'u8[1024]{0}', space=vmem, size = 0x400, scoped, tag = 'output window, operand 0, single buffered']
    #allocation3 [shape = 's32[1]{0}', space=sflag, size = 0x4, scoped, tag = 'scoped memory for mlpl_encoder_forward.1']
    %15 = vsyncpa [#allocation3], 0
    // Predicated region
    $region2: #{mlpl_encoder_forward.1} parent=1 // pred_check
      _
    $region3: #{mlpl_encoder_forward.1} parent=1 // pred_check_branch
      %17 = sbr.rel (0) target = $region5
    $region4: #{mlpl_encoder_forward.1} parent=1 // pred_region
      _
    $region5: #{mlpl_encoder_forward.1} parent=1 // pred_fallthru
      _
    // Predicated region
    $region6: #{mlpl_encoder_forward.1} parent=1 // pred_check
      _
    $region7: #{mlpl_encoder_forward.1} parent=1 // pred_check_branch
      %19 = sbr.rel (0) target = $region9
    $region8: #{mlpl_encoder_forward.1} parent=1 // pred_region
      _
    $region9: #{mlpl_encoder_forward.1} parent=1 // pred_fallthru
      _
    // Predicated region
    $region10: #{mlpl_encoder_forward.1} parent=1 // pred_check
      _
    $region11: #{mlpl_encoder_forward.1} parent=1 // pred_check_branch
      %21 = sbr.rel (0) target = $region13
    $region12: #{mlpl_encoder_forward.1} parent=1 // pred_region
      _
    $region13: #{mlpl_encoder_forward.1} parent=1 // pred_fallthru
      _
    // Predicated region
    $region14: #{mlpl_encoder_forward.1} parent=1 // pred_check
      _
    $region15: #{mlpl_encoder_forward.1} parent=1 // pred_check_branch
      %23 = sbr.rel (0) target = $region17
    $region16: #{mlpl_encoder_forward.1} parent=1 // pred_region
      _
    $region17: #{mlpl_encoder_forward.1} parent=1 // pred_fallthru
      _
    // Predicated region
    $region18: #{mlpl_encoder_forward.1} parent=1 // pred_check
      _
    $region19: #{mlpl_encoder_forward.1} parent=1 // pred_check_branch
      %25 = sbr.rel (0) target = $region21
    $region20: #{mlpl_encoder_forward.1} parent=1 // pred_region
      _
    $region21: #{mlpl_encoder_forward.1} parent=1 // pred_fallthru
      _
    // Predicated region
    $region22: #{mlpl_encoder_forward.1} parent=1 // pred_check
      _
    $region23: #{mlpl_encoder_forward.1} parent=1 // pred_check_branch
      %27 = sbr.rel (0) target = $region25
    $region24: #{mlpl_encoder_forward.1} parent=1 // pred_region
      _
    $region25: #{mlpl_encoder_forward.1} parent=1 // pred_fallthru
      _
    // Predicated region
    $region26: #{mlpl_encoder_forward.1} parent=1 // pred_check
      _
    $region27: #{mlpl_encoder_forward.1} parent=1 // pred_check_branch
      %29 = sbr.rel (0) target = $region29
    $region28: #{mlpl_encoder_forward.1} parent=1 // pred_region
      _
    $region29: #{mlpl_encoder_forward.1} parent=1 // pred_fallthru
      _
    // Predicated region
    $region30: #{mlpl_encoder_forward.1} parent=1 // pred_check
      _
    $region31: #{mlpl_encoder_forward.1} parent=1 // pred_check_branch
      %31 = sbr.rel (0) target = $region33
    $region32: #{mlpl_encoder_forward.1} parent=1 // pred_region
      _
    $region33: #{mlpl_encoder_forward.1} parent=1 // pred_fallthru
      _
    // Predicated region
    $region34: #{mlpl_encoder_forward.1} parent=1 // pred_check
      _
    $region35: #{mlpl_encoder_forward.1} parent=1 // pred_check_branch
      %33 = sbr.rel (0) target = $region37
    $region36: #{mlpl_encoder_forward.1} parent=1 // pred_region
      _
    $region37: #{mlpl_encoder_forward.1} parent=1 // pred_fallthru
      _
    // Predicated region
    $region38: #{mlpl_encoder_forward.1} parent=1 // pred_check
      _
    $region39: #{mlpl_encoder_forward.1} parent=1 // pred_check_branch
      %35 = sbr.rel (0) target = $region41
    $region40: #{mlpl_encoder_forward.1} parent=1 // pred_region
      _
    $region41: #{mlpl_encoder_forward.1} parent=1 // pred_fallthru
      _
    %v37 = vld [vmem:[%s5] sm:$0xf]
    %v38 = vld [vmem:[%s5 + $0x4] sm:$0xf]
    %v39 = vld [vmem:[%s5 + $0x8] sm:$0xf]
    %v40 = vld [vmem:[%s5 + $0xc] sm:$0xf]
    %v41 = vld [vmem:[%s7] sm:$0x1]
    %v42 = vld [vmem:[%s3] sm:$0xf]
    %v43 = vld [vmem:[%s3 + $0x4] sm:$0xf]
    %v44 = vld [vmem:[%s3 + $0x8] sm:$0xf]
    %v45 = vld [vmem:[%s3 + $0xc] sm:$0xf]
    %v46 = vld [vmem:[%s3 + $0x10] sm:$0xf]
    %v47 = vld [vmem:[%s3 + $0x14] sm:$0xf]
    %v48 = vld [vmem:[%s3 + $0x18] sm:$0xf]
    %v49 = vld [vmem:[%s3 + $0x1c] sm:$0xf]
    %v50 = vld [vmem:[%s4] sm:$0xf]
    %v51 = vld [vmem:[%s4 + $0x4] sm:$0xf]
    %v52 = vld [vmem:[%s4 + $0x8] sm:$0xf]
    %v53 = vld [vmem:[%s4 + $0xc] sm:$0xf]
    %v54 = vld [vmem:[%s6] sm:$0x1]
    %v56 = vlaneseq
    %v57 = vshrl.u32 %v56, 7
    %v58 = vsub.s32 0, %v57
    %v59 = vrot.slane %v54, %v58
    %v69 = vunpack.c.l.b16 %v42
    %v70 = vunpack.c.l.b16 %v43
    %v71 = vunpack.c.l.b16 %v44
    %v72 = vunpack.c.l.b16 %v45
    %v73 = vunpack.c.l.b16 %v46
    %v74 = vunpack.c.l.b16 %v47
    %v75 = vunpack.c.l.b16 %v48
    %v76 = vunpack.c.l.b16 %v49
    %v77 = vpack.c.b16 %v70, %v69
    %v78 = vpack.c.b16 %v72, %v71
    %v79 = vpack.c.b16 %v74, %v73
    %v80 = vpack.c.b16 %v76, %v75
    %v85 = vunpack.c.l.b16 %v50
    %v86 = vunpack.c.l.b16 %v51
    %v87 = vunpack.c.l.b16 %v52
    %v88 = vunpack.c.l.b16 %v53
    %v89 = vpack.c.b16 %v86, %v85
    %v90 = vpack.c.b16 %v88, %v87
    %vm93 = vcmask 261120
    %v95 = vsel %vm93, %v77, 0
    %v98 = vsel %vm93, %v78, 0
    %v101 = vsel %vm93, %v79, 0
    %v104 = vsel %vm93, %v80, 0
    %106 = vmatprep.subr.bf16.mxu0 0
    %107 = vmatpush1.bf16.msra.mxu0 %v89
    %108 = vmatprep.subr.bf16.mxu0 0
    %109 = vmatpush1.bf16.msra.mxu0 %v90
    %110 = vmatprep.subr.bf16.mxu0 0
    %111 = vmatpush1.bf16.msra.mxu0 0
    %112 = vmatprep.subr.bf16.mxu0 0
    %113 = vmatpush1.bf16.msra.mxu0 0
    %114 = vmatprep.subr.bf16.mxu0 0
    %115 = vmatpush1.bf16.msra.mxu0 0
    %116 = vmatprep.subr.bf16.mxu0 0
    %117 = vmatpush1.bf16.msra.mxu0 0
    %118 = vmatprep.subr.bf16.mxu0 0
    %119 = vmatpush1.bf16.msra.mxu0 0
    %120 = vmatprep.subr.bf16.mxu0 0
    %121 = vmatpush1.bf16.msra.mxu0 0
    %122 = vmatprep.subr.bf16.mxu0 0
    %123 = vmatpush1.bf16.msra.mxu0 0
    %124 = vmatprep.subr.bf16.mxu0 0
    %125 = vmatpush1.bf16.msra.mxu0 0
    %126 = vmatprep.subr.bf16.mxu0 0
    %127 = vmatpush1.bf16.msra.mxu0 0
    %128 = vmatprep.subr.bf16.mxu0 0
    %129 = vmatpush1.bf16.msra.mxu0 0
    %130 = vmatprep.subr.bf16.mxu0 0
    %131 = vmatpush1.bf16.msra.mxu0 0
    %132 = vmatprep.subr.bf16.mxu0 0
    %133 = vmatpush1.bf16.msra.mxu0 0
    %134 = vmatprep.subr.bf16.mxu0 0
    %135 = vmatpush1.bf16.msra.mxu0 0
    %136 = vmatprep.subr.bf16.mxu0 0
    %137 = vmatpush1.bf16.msra.mxu0 0
    %138 = vmatprep.mubr.bf16.mxu0 0
    %139 = vmatmul.mubr.bf16.gmra.mrb[0].mxu0 %v95
    %v140 = vpop.f32.mrb[0].mxu0
    %v141 = vadd.f32 %v59, %v140
    %v142 = vpop.f32.mrb[0].mxu0
    %v143 = vpop.f32.mrb[0].mxu0
    %v144 = vadd.f32 %v59, %v143
    %v145 = vpop.f32.mrb[0].mxu0
    %146 = vmatprep.mubr.bf16.mxu0 0
    %147 = vmatmul.mubr.bf16.gmra.mrb[0].mxu0 %v98
    %v148 = vpop.f32.mrb[0].mxu0
    %v149 = vadd.f32 %v59, %v148
    %v150 = vpop.f32.mrb[0].mxu0
    %v151 = vpop.f32.mrb[0].mxu0
    %v152 = vadd.f32 %v59, %v151
    %v153 = vpop.f32.mrb[0].mxu0
    %154 = vmatprep.mubr.bf16.mxu0 0
    %155 = vmatmul.mubr.bf16.gmra.mrb[0].mxu0 %v101
    %v156 = vpop.f32.mrb[0].mxu0
    %v157 = vadd.f32 %v59, %v156
    %v158 = vpop.f32.mrb[0].mxu0
    %v159 = vpop.f32.mrb[0].mxu0
    %v160 = vadd.f32 %v59, %v159
    %v161 = vpop.f32.mrb[0].mxu0
    %162 = vmatprep.mubr.bf16.mxu0 0
    %163 = vmatmul.mubr.bf16.gmra.mrb[0].mxu0 %v104
    %v164 = vpop.f32.mrb[0].mxu0
    %v165 = vadd.f32 %v59, %v164
    %v166 = vpop.f32.mrb[0].mxu0
    %v167 = vpop.f32.mrb[0].mxu0
    %v168 = vadd.f32 %v59, %v167
    %v169 = vpop.f32.mrb[0].mxu0
    %170 = vdwg.mxu0
    %v171 = vld [vmem:[%s0] sm:$0xff]
    %v176 = vunpack.c.l.b16 %v37
    %v177 = vunpack.c.l.b16 %v38
    %v178 = vunpack.c.l.b16 %v39
    %v179 = vunpack.c.l.b16 %v40
    %v180 = vpack.c.b16 %v177, %v176
    %v181 = vpack.c.b16 %v179, %v178
    %v185 = vsel %vm93, 0, 0
    %187 = vmatprep.subr.bf16.mxu0 0
    %188 = vmatpush1.bf16.msra.mxu0 %v180
    %189 = vmatprep.subr.bf16.mxu0 0
    %190 = vmatpush1.bf16.msra.mxu0 %v181
    %191 = vmatprep.subr.bf16.mxu0 0
    %192 = vmatpush1.bf16.msra.mxu0 0
    %193 = vmatprep.subr.bf16.mxu0 0
    %194 = vmatpush1.bf16.msra.mxu0 0
    %195 = vmatprep.subr.bf16.mxu0 0
    %196 = vmatpush1.bf16.msra.mxu0 0
    %197 = vmatprep.subr.bf16.mxu0 0
    %198 = vmatpush1.bf16.msra.mxu0 0
    %199 = vmatprep.subr.bf16.mxu0 0
    %200 = vmatpush1.bf16.msra.mxu0 0
    %201 = vmatprep.subr.bf16.mxu0 0
    %202 = vmatpush1.bf16.msra.mxu0 0
    %203 = vmatprep.subr.bf16.mxu0 0
    %204 = vmatpush1.bf16.msra.mxu0 0
    %205 = vmatprep.subr.bf16.mxu0 0
    %206 = vmatpush1.bf16.msra.mxu0 0
    %207 = vmatprep.subr.bf16.mxu0 0
    %208 = vmatpush1.bf16.msra.mxu0 0
    %209 = vmatprep.subr.bf16.mxu0 0
    %210 = vmatpush1.bf16.msra.mxu0 0
    %211 = vmatprep.subr.bf16.mxu0 0
    %212 = vmatpush1.bf16.msra.mxu0 0
    %213 = vmatprep.subr.bf16.mxu0 0
    %214 = vmatpush1.bf16.msra.mxu0 0
    %215 = vmatprep.subr.bf16.mxu0 0
    %216 = vmatpush1.bf16.msra.mxu0 0
    %217 = vmatprep.subr.bf16.mxu0 0
    %218 = vmatpush1.bf16.msra.mxu0 0
    %219 = vmatprep.mubr.bf16.mxu0 0
    %220 = vmatmul.mubr.bf16.gmra.mrb[0].mxu0 %v185
    %v221 = vpop.f32.mrb[0].mxu0
    %v222 = vadd.f32 0.0, %v221
    %v223 = vpop.f32.mrb[0].mxu0
    %v224 = vpop.f32.mrb[0].mxu0
    %v225 = vpop.f32.mrb[0].mxu0
    %226 = vdwg.mxu0
    %v227 = vadd.f32 %v141, %v222
    %v228 = vxor.u32 %v227, 2147483648
    %v229 = vmul.f32 %v228, 1.442695
    %v230 = vpow.pop %v229
    %v231 = vadd.f32 %v230, 1.0
    %v232 = vrcp.pop %v231
    %v233 = vmul.f32 1.0, %v232
    %v235 = vlaneseq
    %v236 = vshrl.u32 %v235, 7
    %v237 = vsub.s32 0, %v236
    %v238 = vrot.slane %v41, %v237
    %239 = vrot.lane.b32.xlu0 %v238, 64
    %v240 = vpop.permute.xlu0 %239
    %v242 = vadd.f32 %v222, %v240
    %244 = vrot.lane.b32.xlu0 %v242, 64
    %v245 = vpop.permute.xlu0 %244
    %v247 = vmul.f32 %v233, %v245
    %249 = vrot.lane.b32.xlu0 %v247, 64
    %v250 = vpop.permute.xlu0 %249
    %v252 = vadd.f32 %v141, %v250
    %v253 = vtanh.pop %v252
    %v254 = vsub.f32 1.0, %v233
    %256 = vrot.lane.b32.xlu0 %v253, 96
    %v257 = vpop.permute.xlu0 %256
    %v259 = vmul.f32 %v254, %v257
    %v260 = vmul.f32 %v233, 0.0
    %v261 = vadd.f32 %v259, %v260
    %vm262 = vcmp.gt.s32.totalorder %v171, 0
    %v263 = vsel %vm262, 1, 0
    %264 = vset.pattern.permute.xlu0 0
    %265 = vperm.xlu0 %264, %v263
    %v266 = vpop.permute.xlu0 %265
    %vm267 = vcmp.eq.s32.totalorder %v266, 1
    %v268 = vsel %vm267, %v261, 0.0
    %v269 = vpack.c.bf16 %v268, %v268
    %271 = vrot.lane.b32.xlu0 %v269, 96
    %v272 = vpop.permute.xlu0 %271
    %v274 = vsel %vm93, %v272, 0
    %276 = vmatprep.subr.bf16.mxu0 0
    %277 = vmatpush1.bf16.msra.mxu0 %v180
    %278 = vmatprep.subr.bf16.mxu0 0
    %279 = vmatpush1.bf16.msra.mxu0 %v181
    %280 = vmatprep.subr.bf16.mxu0 0
    %281 = vmatpush1.bf16.msra.mxu0 0
    %282 = vmatprep.subr.bf16.mxu0 0
    %283 = vmatpush1.bf16.msra.mxu0 0
    %284 = vmatprep.subr.bf16.mxu0 0
    %285 = vmatpush1.bf16.msra.mxu0 0
    %286 = vmatprep.subr.bf16.mxu0 0
    %287 = vmatpush1.bf16.msra.mxu0 0
    %288 = vmatprep.subr.bf16.mxu0 0
    %289 = vmatpush1.bf16.msra.mxu0 0
    %290 = vmatprep.subr.bf16.mxu0 0
    %291 = vmatpush1.bf16.msra.mxu0 0
    %292 = vmatprep.subr.bf16.mxu0 0
    %293 = vmatpush1.bf16.msra.mxu0 0
    %294 = vmatprep.subr.bf16.mxu0 0
    %295 = vmatpush1.bf16.msra.mxu0 0
    %296 = vmatprep.subr.bf16.mxu0 0
    %297 = vmatpush1.bf16.msra.mxu0 0
    %298 = vmatprep.subr.bf16.mxu0 0
    %299 = vmatpush1.bf16.msra.mxu0 0
    %300 = vmatprep.subr.bf16.mxu0 0
    %301 = vmatpush1.bf16.msra.mxu0 0
    %302 = vmatprep.subr.bf16.mxu0 0
    %303 = vmatpush1.bf16.msra.mxu0 0
    %304 = vmatprep.subr.bf16.mxu0 0
    %305 = vmatpush1.bf16.msra.mxu0 0
    %306 = vmatprep.subr.bf16.mxu0 0
    %307 = vmatpush1.bf16.msra.mxu0 0
    %308 = vmatprep.mubr.bf16.mxu0 0
    %309 = vmatmul.mubr.bf16.gmra.mrb[0].mxu0 %v274
    %v310 = vpop.f32.mrb[0].mxu0
    %v311 = vadd.f32 0.0, %v310
    %v312 = vpop.f32.mrb[0].mxu0
    %v313 = vpop.f32.mrb[0].mxu0
    %v314 = vpop.f32.mrb[0].mxu0
    %315 = vdwg.mxu0
    %v316 = vadd.f32 %v144, %v311
    %v317 = vxor.u32 %v316, 2147483648
    %v318 = vmul.f32 %v317, 1.442695
    %v319 = vpow.pop %v318
    %v320 = vadd.f32 %v319, 1.0
    %v321 = vrcp.pop %v320
    %v322 = vmul.f32 1.0, %v321
    %v323 = vadd.f32 %v311, %v240
    %325 = vrot.lane.b32.xlu0 %v323, 64
    %v326 = vpop.permute.xlu0 %325
    %v328 = vmul.f32 %v322, %v326
    %330 = vrot.lane.b32.xlu0 %v328, 64
    %v331 = vpop.permute.xlu0 %330
    %v333 = vadd.f32 %v144, %v331
    %v334 = vtanh.pop %v333
    %v335 = vsub.f32 1.0, %v322
    %337 = vrot.lane.b32.xlu0 %v334, 96
    %v338 = vpop.permute.xlu0 %337
    %v340 = vmul.f32 %v335, %v338
    %v341 = vmul.f32 %v322, %v268
    %v342 = vadd.f32 %v340, %v341
    %vm343 = vcmp.gt.s32.totalorder %v171, 1
    %v344 = vsel %vm343, 1, 0
    %345 = vset.pattern.permute.xlu0 0
    %346 = vperm.xlu0 %345, %v344
    %v347 = vpop.permute.xlu0 %346
    %vm348 = vcmp.eq.s32.totalorder %v347, 1
    %v349 = vsel %vm348, %v342, %v268
    %v350 = vpack.c.bf16 %v349, %v349
    %352 = vrot.lane.b32.xlu0 %v350, 96
    %v353 = vpop.permute.xlu0 %352
    %v355 = vsel %vm93, %v353, 0
    %357 = vmatprep.subr.bf16.mxu0 0
    %358 = vmatpush1.bf16.msra.mxu0 %v180
    %359 = vmatprep.subr.bf16.mxu0 0
    %360 = vmatpush1.bf16.msra.mxu0 %v181
    %361 = vmatprep.subr.bf16.mxu0 0
    %362 = vmatpush1.bf16.msra.mxu0 0
    %363 = vmatprep.subr.bf16.mxu0 0
    %364 = vmatpush1.bf16.msra.mxu0 0
    %365 = vmatprep.subr.bf16.mxu0 0
    %366 = vmatpush1.bf16.msra.mxu0 0
    %367 = vmatprep.subr.bf16.mxu0 0
    %368 = vmatpush1.bf16.msra.mxu0 0
    %369 = vmatprep.subr.bf16.mxu0 0
    %370 = vmatpush1.bf16.msra.mxu0 0
    %371 = vmatprep.subr.bf16.mxu0 0
    %372 = vmatpush1.bf16.msra.mxu0 0
    %373 = vmatprep.subr.bf16.mxu0 0
    %374 = vmatpush1.bf16.msra.mxu0 0
    %375 = vmatprep.subr.bf16.mxu0 0
    %376 = vmatpush1.bf16.msra.mxu0 0
    %377 = vmatprep.subr.bf16.mxu0 0
    %378 = vmatpush1.bf16.msra.mxu0 0
    %379 = vmatprep.subr.bf16.mxu0 0
    %380 = vmatpush1.bf16.msra.mxu0 0
    %381 = vmatprep.subr.bf16.mxu0 0
    %382 = vmatpush1.bf16.msra.mxu0 0
    %383 = vmatprep.subr.bf16.mxu0 0
    %384 = vmatpush1.bf16.msra.mxu0 0
    %385 = vmatprep.subr.bf16.mxu0 0
    %386 = vmatpush1.bf16.msra.mxu0 0
    %387 = vmatprep.subr.bf16.mxu0 0
    %388 = vmatpush1.bf16.msra.mxu0 0
    %389 = vmatprep.mubr.bf16.mxu0 0
    %390 = vmatmul.mubr.bf16.gmra.mrb[0].mxu0 %v355
    %v391 = vpop.f32.mrb[0].mxu0
    %v392 = vadd.f32 0.0, %v391
    %v393 = vpop.f32.mrb[0].mxu0
    %v394 = vpop.f32.mrb[0].mxu0
    %v395 = vpop.f32.mrb[0].mxu0
    %396 = vdwg.mxu0
    %v397 = vadd.f32 %v149, %v392
    %v398 = vxor.u32 %v397, 2147483648
    %v399 = vmul.f32 %v398, 1.442695
    %v400 = vpow.pop %v399
    %v401 = vadd.f32 %v400, 1.0
    %v402 = vrcp.pop %v401
    %v403 = vmul.f32 1.0, %v402
    %v404 = vadd.f32 %v392, %v240
    %406 = vrot.lane.b32.xlu0 %v404, 64
    %v407 = vpop.permute.xlu0 %406
    %v409 = vmul.f32 %v403, %v407
    %411 = vrot.lane.b32.xlu0 %v409, 64
    %v412 = vpop.permute.xlu0 %411
    %v414 = vadd.f32 %v149, %v412
    %v415 = vtanh.pop %v414
    %v416 = vsub.f32 1.0, %v403
    %418 = vrot.lane.b32.xlu0 %v415, 96
    %v419 = vpop.permute.xlu0 %418
    %v421 = vmul.f32 %v416, %v419
    %v422 = vmul.f32 %v403, %v349
    %v423 = vadd.f32 %v421, %v422
    %vm424 = vcmp.gt.s32.totalorder %v171, 2
    %v425 = vsel %vm424, 1, 0
    %426 = vset.pattern.permute.xlu0 0
    %427 = vperm.xlu0 %426, %v425
    %v428 = vpop.permute.xlu0 %427
    %vm429 = vcmp.eq.s32.totalorder %v428, 1
    %v430 = vsel %vm429, %v423, %v349
    %v431 = vpack.c.bf16 %v430, %v430
    %433 = vrot.lane.b32.xlu0 %v431, 96
    %v434 = vpop.permute.xlu0 %433
    %v436 = vsel %vm93, %v434, 0
    %438 = vmatprep.subr.bf16.mxu0 0
    %439 = vmatpush1.bf16.msra.mxu0 %v180
    %440 = vmatprep.subr.bf16.mxu0 0
    %441 = vmatpush1.bf16.msra.mxu0 %v181
    %442 = vmatprep.subr.bf16.mxu0 0
    %443 = vmatpush1.bf16.msra.mxu0 0
    %444 = vmatprep.subr.bf16.mxu0 0
    %445 = vmatpush1.bf16.msra.mxu0 0
    %446 = vmatprep.subr.bf16.mxu0 0
    %447 = vmatpush1.bf16.msra.mxu0 0
    %448 = vmatprep.subr.bf16.mxu0 0
    %449 = vmatpush1.bf16.msra.mxu0 0
    %450 = vmatprep.subr.bf16.mxu0 0
    %451 = vmatpush1.bf16.msra.mxu0 0
    %452 = vmatprep.subr.bf16.mxu0 0
    %453 = vmatpush1.bf16.msra.mxu0 0
    %454 = vmatprep.subr.bf16.mxu0 0
    %455 = vmatpush1.bf16.msra.mxu0 0
    %456 = vmatprep.subr.bf16.mxu0 0
    %457 = vmatpush1.bf16.msra.mxu0 0
    %458 = vmatprep.subr.bf16.mxu0 0
    %459 = vmatpush1.bf16.msra.mxu0 0
    %460 = vmatprep.subr.bf16.mxu0 0
    %461 = vmatpush1.bf16.msra.mxu0 0
    %462 = vmatprep.subr.bf16.mxu0 0
    %463 = vmatpush1.bf16.msra.mxu0 0
    %464 = vmatprep.subr.bf16.mxu0 0
    %465 = vmatpush1.bf16.msra.mxu0 0
    %466 = vmatprep.subr.bf16.mxu0 0
    %467 = vmatpush1.bf16.msra.mxu0 0
    %468 = vmatprep.subr.bf16.mxu0 0
    %469 = vmatpush1.bf16.msra.mxu0 0
    %470 = vmatprep.mubr.bf16.mxu0 0
    %471 = vmatmul.mubr.bf16.gmra.mrb[0].mxu0 %v436
    %v472 = vpop.f32.mrb[0].mxu0
    %v473 = vadd.f32 0.0, %v472
    %v474 = vpop.f32.mrb[0].mxu0
    %v475 = vpop.f32.mrb[0].mxu0
    %v476 = vpop.f32.mrb[0].mxu0
    %477 = vdwg.mxu0
    %v478 = vadd.f32 %v152, %v473
    %v479 = vxor.u32 %v478, 2147483648
    %v480 = vmul.f32 %v479, 1.442695
    %v481 = vpow.pop %v480
    %v482 = vadd.f32 %v481, 1.0
    %v483 = vrcp.pop %v482
    %v484 = vmul.f32 1.0, %v483
    %v485 = vadd.f32 %v473, %v240
    %487 = vrot.lane.b32.xlu0 %v485, 64
    %v488 = vpop.permute.xlu0 %487
    %v490 = vmul.f32 %v484, %v488
    %492 = vrot.lane.b32.xlu0 %v490, 64
    %v493 = vpop.permute.xlu0 %492
    %v495 = vadd.f32 %v152, %v493
    %v496 = vtanh.pop %v495
    %v497 = vsub.f32 1.0, %v484
    %499 = vrot.lane.b32.xlu0 %v496, 96
    %v500 = vpop.permute.xlu0 %499
    %v502 = vmul.f32 %v497, %v500
    %v503 = vmul.f32 %v484, %v430
    %v504 = vadd.f32 %v502, %v503
    %vm505 = vcmp.gt.s32.totalorder %v171, 3
    %v506 = vsel %vm505, 1, 0
    %507 = vset.pattern.permute.xlu0 0
    %508 = vperm.xlu0 %507, %v506
    %v509 = vpop.permute.xlu0 %508
    %vm510 = vcmp.eq.s32.totalorder %v509, 1
    %v511 = vsel %vm510, %v504, %v430
    %v512 = vpack.c.bf16 %v511, %v511
    %514 = vrot.lane.b32.xlu0 %v512, 96
    %v515 = vpop.permute.xlu0 %514
    %v517 = vsel %vm93, %v515, 0
    %519 = vmatprep.subr.bf16.mxu0 0
    %520 = vmatpush1.bf16.msra.mxu0 %v180
    %521 = vmatprep.subr.bf16.mxu0 0
    %522 = vmatpush1.bf16.msra.mxu0 %v181
    %523 = vmatprep.subr.bf16.mxu0 0
    %524 = vmatpush1.bf16.msra.mxu0 0
    %525 = vmatprep.subr.bf16.mxu0 0
    %526 = vmatpush1.bf16.msra.mxu0 0
    %527 = vmatprep.subr.bf16.mxu0 0
    %528 = vmatpush1.bf16.msra.mxu0 0
    %529 = vmatprep.subr.bf16.mxu0 0
    %530 = vmatpush1.bf16.msra.mxu0 0
    %531 = vmatprep.subr.bf16.mxu0 0
    %532 = vmatpush1.bf16.msra.mxu0 0
    %533 = vmatprep.subr.bf16.mxu0 0
    %534 = vmatpush1.bf16.msra.mxu0 0
    %535 = vmatprep.subr.bf16.mxu0 0
    %536 = vmatpush1.bf16.msra.mxu0 0
    %537 = vmatprep.subr.bf16.mxu0 0
    %538 = vmatpush1.bf16.msra.mxu0 0
    %539 = vmatprep.subr.bf16.mxu0 0
    %540 = vmatpush1.bf16.msra.mxu0 0
    %541 = vmatprep.subr.bf16.mxu0 0
    %542 = vmatpush1.bf16.msra.mxu0 0
    %543 = vmatprep.subr.bf16.mxu0 0
    %544 = vmatpush1.bf16.msra.mxu0 0
    %545 = vmatprep.subr.bf16.mxu0 0
    %546 = vmatpush1.bf16.msra.mxu0 0
    %547 = vmatprep.subr.bf16.mxu0 0
    %548 = vmatpush1.bf16.msra.mxu0 0
    %549 = vmatprep.subr.bf16.mxu0 0
    %550 = vmatpush1.bf16.msra.mxu0 0
    %551 = vmatprep.mubr.bf16.mxu0 0
    %552 = vmatmul.mubr.bf16.gmra.mrb[0].mxu0 %v517
    %v553 = vpop.f32.mrb[0].mxu0
    %v554 = vadd.f32 0.0, %v553
    %v555 = vpop.f32.mrb[0].mxu0
    %v556 = vpop.f32.mrb[0].mxu0
    %v557 = vpop.f32.mrb[0].mxu0
    %558 = vdwg.mxu0
    %v559 = vadd.f32 %v157, %v554
    %v560 = vxor.u32 %v559, 2147483648
    %v561 = vmul.f32 %v560, 1.442695
    %v562 = vpow.pop %v561
    %v563 = vadd.f32 %v562, 1.0
    %v564 = vrcp.pop %v563
    %v565 = vmul.f32 1.0, %v564
    %v566 = vadd.f32 %v554, %v240
    %568 = vrot.lane.b32.xlu0 %v566, 64
    %v569 = vpop.permute.xlu0 %568
    %v571 = vmul.f32 %v565, %v569
    %573 = vrot.lane.b32.xlu0 %v571, 64
    %v574 = vpop.permute.xlu0 %573
    %v576 = vadd.f32 %v157, %v574
    %v577 = vtanh.pop %v576
    %v578 = vsub.f32 1.0, %v565
    %580 = vrot.lane.b32.xlu0 %v577, 96
    %v581 = vpop.permute.xlu0 %580
    %v583 = vmul.f32 %v578, %v581
    %v584 = vmul.f32 %v565, %v511
    %v585 = vadd.f32 %v583, %v584
    %vm586 = vcmp.gt.s32.totalorder %v171, 4
    %v587 = vsel %vm586, 1, 0
    %588 = vset.pattern.permute.xlu0 0
    %589 = vperm.xlu0 %588, %v587
    %v590 = vpop.permute.xlu0 %589
    %vm591 = vcmp.eq.s32.totalorder %v590, 1
    %v592 = vsel %vm591, %v585, %v511
    %v593 = vpack.c.bf16 %v592, %v592
    %595 = vrot.lane.b32.xlu0 %v593, 96
    %v596 = vpop.permute.xlu0 %595
    %v598 = vsel %vm93, %v596, 0
    %600 = vmatprep.subr.bf16.mxu0 0
    %601 = vmatpush1.bf16.msra.mxu0 %v180
    %602 = vmatprep.subr.bf16.mxu0 0
    %603 = vmatpush1.bf16.msra.mxu0 %v181
    %604 = vmatprep.subr.bf16.mxu0 0
    %605 = vmatpush1.bf16.msra.mxu0 0
    %606 = vmatprep.subr.bf16.mxu0 0
    %607 = vmatpush1.bf16.msra.mxu0 0
    %608 = vmatprep.subr.bf16.mxu0 0
    %609 = vmatpush1.bf16.msra.mxu0 0
    %610 = vmatprep.subr.bf16.mxu0 0
    %611 = vmatpush1.bf16.msra.mxu0 0
    %612 = vmatprep.subr.bf16.mxu0 0
    %613 = vmatpush1.bf16.msra.mxu0 0
    %614 = vmatprep.subr.bf16.mxu0 0
    %615 = vmatpush1.bf16.msra.mxu0 0
    %616 = vmatprep.subr.bf16.mxu0 0
    %617 = vmatpush1.bf16.msra.mxu0 0
    %618 = vmatprep.subr.bf16.mxu0 0
    %619 = vmatpush1.bf16.msra.mxu0 0
    %620 = vmatprep.subr.bf16.mxu0 0
    %621 = vmatpush1.bf16.msra.mxu0 0
    %622 = vmatprep.subr.bf16.mxu0 0
    %623 = vmatpush1.bf16.msra.mxu0 0
    %624 = vmatprep.subr.bf16.mxu0 0
    %625 = vmatpush1.bf16.msra.mxu0 0
    %626 = vmatprep.subr.bf16.mxu0 0
    %627 = vmatpush1.bf16.msra.mxu0 0
    %628 = vmatprep.subr.bf16.mxu0 0
    %629 = vmatpush1.bf16.msra.mxu0 0
    %630 = vmatprep.subr.bf16.mxu0 0
    %631 = vmatpush1.bf16.msra.mxu0 0
    %632 = vmatprep.mubr.bf16.mxu0 0
    %633 = vmatmul.mubr.bf16.gmra.mrb[0].mxu0 %v598
    %v634 = vpop.f32.mrb[0].mxu0
    %v635 = vadd.f32 0.0, %v634
    %v636 = vpop.f32.mrb[0].mxu0
    %v637 = vpop.f32.mrb[0].mxu0
    %v638 = vpop.f32.mrb[0].mxu0
    %639 = vdwg.mxu0
    %v640 = vadd.f32 %v160, %v635
    %v641 = vxor.u32 %v640, 2147483648
    %v642 = vmul.f32 %v641, 1.442695
    %v643 = vpow.pop %v642
    %v644 = vadd.f32 %v643, 1.0
    %v645 = vrcp.pop %v644
    %v646 = vmul.f32 1.0, %v645
    %v647 = vadd.f32 %v635, %v240
    %649 = vrot.lane.b32.xlu0 %v647, 64
    %v650 = vpop.permute.xlu0 %649
    %v652 = vmul.f32 %v646, %v650
    %654 = vrot.lane.b32.xlu0 %v652, 64
    %v655 = vpop.permute.xlu0 %654
    %v657 = vadd.f32 %v160, %v655
    %v658 = vtanh.pop %v657
    %v659 = vsub.f32 1.0, %v646
    %661 = vrot.lane.b32.xlu0 %v658, 96
    %v662 = vpop.permute.xlu0 %661
    %v664 = vmul.f32 %v659, %v662
    %v665 = vmul.f32 %v646, %v592
    %v666 = vadd.f32 %v664, %v665
    %vm667 = vcmp.gt.s32.totalorder %v171, 5
    %v668 = vsel %vm667, 1, 0
    %669 = vset.pattern.permute.xlu0 0
    %670 = vperm.xlu0 %669, %v668
    %v671 = vpop.permute.xlu0 %670
    %vm672 = vcmp.eq.s32.totalorder %v671, 1
    %v673 = vsel %vm672, %v666, %v592
    %v674 = vpack.c.bf16 %v673, %v673
    %676 = vrot.lane.b32.xlu0 %v674, 96
    %v677 = vpop.permute.xlu0 %676
    %v679 = vsel %vm93, %v677, 0
    %681 = vmatprep.subr.bf16.mxu0 0
    %682 = vmatpush1.bf16.msra.mxu0 %v180
    %683 = vmatprep.subr.bf16.mxu0 0
    %684 = vmatpush1.bf16.msra.mxu0 %v181
    %685 = vmatprep.subr.bf16.mxu0 0
    %686 = vmatpush1.bf16.msra.mxu0 0
    %687 = vmatprep.subr.bf16.mxu0 0
    %688 = vmatpush1.bf16.msra.mxu0 0
    %689 = vmatprep.subr.bf16.mxu0 0
    %690 = vmatpush1.bf16.msra.mxu0 0
    %691 = vmatprep.subr.bf16.mxu0 0
    %692 = vmatpush1.bf16.msra.mxu0 0
    %693 = vmatprep.subr.bf16.mxu0 0
    %694 = vmatpush1.bf16.msra.mxu0 0
    %695 = vmatprep.subr.bf16.mxu0 0
    %696 = vmatpush1.bf16.msra.mxu0 0
    %697 = vmatprep.subr.bf16.mxu0 0
    %698 = vmatpush1.bf16.msra.mxu0 0
    %699 = vmatprep.subr.bf16.mxu0 0
    %700 = vmatpush1.bf16.msra.mxu0 0
    %701 = vmatprep.subr.bf16.mxu0 0
    %702 = vmatpush1.bf16.msra.mxu0 0
    %703 = vmatprep.subr.bf16.mxu0 0
    %704 = vmatpush1.bf16.msra.mxu0 0
    %705 = vmatprep.subr.bf16.mxu0 0
    %706 = vmatpush1.bf16.msra.mxu0 0
    %707 = vmatprep.subr.bf16.mxu0 0
    %708 = vmatpush1.bf16.msra.mxu0 0
    %709 = vmatprep.subr.bf16.mxu0 0
    %710 = vmatpush1.bf16.msra.mxu0 0
    %711 = vmatprep.subr.bf16.mxu0 0
    %712 = vmatpush1.bf16.msra.mxu0 0
    %713 = vmatprep.mubr.bf16.mxu0 0
    %714 = vmatmul.mubr.bf16.gmra.mrb[0].mxu0 %v679
    %v715 = vpop.f32.mrb[0].mxu0
    %v716 = vadd.f32 0.0, %v715
    %v717 = vpop.f32.mrb[0].mxu0
    %v718 = vpop.f32.mrb[0].mxu0
    %v719 = vpop.f32.mrb[0].mxu0
    %720 = vdwg.mxu0
    %v721 = vadd.f32 %v165, %v716
    %v722 = vxor.u32 %v721, 2147483648
    %v723 = vmul.f32 %v722, 1.442695
    %v724 = vpow.pop %v723
    %v725 = vadd.f32 %v724, 1.0
    %v726 = vrcp.pop %v725
    %v727 = vmul.f32 1.0, %v726
    %v728 = vadd.f32 %v716, %v240
    %730 = vrot.lane.b32.xlu0 %v728, 64
    %v731 = vpop.permute.xlu0 %730
    %v733 = vmul.f32 %v727, %v731
    %735 = vrot.lane.b32.xlu0 %v733, 64
    %v736 = vpop.permute.xlu0 %735
    %v738 = vadd.f32 %v165, %v736
    %v739 = vtanh.pop %v738
    %v740 = vsub.f32 1.0, %v727
    %742 = vrot.lane.b32.xlu0 %v739, 96
    %v743 = vpop.permute.xlu0 %742
    %v745 = vmul.f32 %v740, %v743
    %v746 = vmul.f32 %v727, %v673
    %v747 = vadd.f32 %v745, %v746
    %vm748 = vcmp.gt.s32.totalorder %v171, 6
    %v749 = vsel %vm748, 1, 0
    %750 = vset.pattern.permute.xlu0 0
    %751 = vperm.xlu0 %750, %v749
    %v752 = vpop.permute.xlu0 %751
    %vm753 = vcmp.eq.s32.totalorder %v752, 1
    %v754 = vsel %vm753, %v747, %v673
    %v755 = vpack.c.bf16 %v754, %v754
    %757 = vrot.lane.b32.xlu0 %v755, 96
    %v758 = vpop.permute.xlu0 %757
    %v760 = vsel %vm93, %v758, 0
    %762 = vmatprep.subr.bf16.mxu0 0
    %763 = vmatpush1.bf16.msra.mxu0 %v180
    %764 = vmatprep.subr.bf16.mxu0 0
    %765 = vmatpush1.bf16.msra.mxu0 %v181
    %766 = vmatprep.subr.bf16.mxu0 0
    %767 = vmatpush1.bf16.msra.mxu0 0
    %768 = vmatprep.subr.bf16.mxu0 0
    %769 = vmatpush1.bf16.msra.mxu0 0
    %770 = vmatprep.subr.bf16.mxu0 0
    %771 = vmatpush1.bf16.msra.mxu0 0
    %772 = vmatprep.subr.bf16.mxu0 0
    %773 = vmatpush1.bf16.msra.mxu0 0
    %774 = vmatprep.subr.bf16.mxu0 0
    %775 = vmatpush1.bf16.msra.mxu0 0
    %776 = vmatprep.subr.bf16.mxu0 0
    %777 = vmatpush1.bf16.msra.mxu0 0
    %778 = vmatprep.subr.bf16.mxu0 0
    %779 = vmatpush1.bf16.msra.mxu0 0
    %780 = vmatprep.subr.bf16.mxu0 0
    %781 = vmatpush1.bf16.msra.mxu0 0
    %782 = vmatprep.subr.bf16.mxu0 0
    %783 = vmatpush1.bf16.msra.mxu0 0
    %784 = vmatprep.subr.bf16.mxu0 0
    %785 = vmatpush1.bf16.msra.mxu0 0
    %786 = vmatprep.subr.bf16.mxu0 0
    %787 = vmatpush1.bf16.msra.mxu0 0
    %788 = vmatprep.subr.bf16.mxu0 0
    %789 = vmatpush1.bf16.msra.mxu0 0
    %790 = vmatprep.subr.bf16.mxu0 0
    %791 = vmatpush1.bf16.msra.mxu0 0
    %792 = vmatprep.subr.bf16.mxu0 0
    %793 = vmatpush1.bf16.msra.mxu0 0
    %794 = vmatprep.mubr.bf16.mxu0 0
    %795 = vmatmul.mubr.bf16.gmra.mrb[0].mxu0 %v760
    %v796 = vpop.f32.mrb[0].mxu0
    %v797 = vadd.f32 0.0, %v796
    %v798 = vpop.f32.mrb[0].mxu0
    %v799 = vpop.f32.mrb[0].mxu0
    %v800 = vpop.f32.mrb[0].mxu0
    %801 = vdwg.mxu0
    %v802 = vadd.f32 %v168, %v797
    %v803 = vxor.u32 %v802, 2147483648
    %v804 = vmul.f32 %v803, 1.442695
    %v805 = vpow.pop %v804
    %v806 = vadd.f32 %v805, 1.0
    %v807 = vrcp.pop %v806
    %v808 = vmul.f32 1.0, %v807
    %v809 = vadd.f32 %v797, %v240
    %811 = vrot.lane.b32.xlu0 %v809, 64
    %v812 = vpop.permute.xlu0 %811
    %v814 = vmul.f32 %v808, %v812
    %816 = vrot.lane.b32.xlu0 %v814, 64
    %v817 = vpop.permute.xlu0 %816
    %v819 = vadd.f32 %v168, %v817
    %v820 = vtanh.pop %v819
    %v821 = vsub.f32 1.0, %v808
    %823 = vrot.lane.b32.xlu0 %v820, 96
    %v824 = vpop.permute.xlu0 %823
    %v826 = vmul.f32 %v821, %v824
    %v827 = vmul.f32 %v808, %v754
    %v828 = vadd.f32 %v826, %v827
    %vm829 = vcmp.gt.s32.totalorder %v171, 7
    %v830 = vsel %vm829, 1, 0
    %831 = vset.pattern.permute.xlu0 0
    %832 = vperm.xlu0 %831, %v830
    %v833 = vpop.permute.xlu0 %832
    %vm834 = vcmp.eq.s32.totalorder %v833, 1
    %v835 = vsel %vm834, %v828, %v754
    %v836 = vld [vmem:[%s2] sm:$0x1]
    %v837 = vpack.c.bf16 %v835, %v835
    %839 = vrot.lane.b32.xlu0 %v837, 96
    %v840 = vpop.permute.xlu0 %839
    %vm841 = vcmask 64512
    %v843 = vsel %vm841, %v836, 0
    %vm845 = vcmask 1043456
    %v847 = vsel %vm845, %v840, 0
    %849 = vmatprep.subr.bf16.mxu0 0
    %850 = vmatpush1.bf16.msra.mxu0 %v847
    %851 = vmatprep.subr.bf16.mxu0 0
    %852 = vmatpush1.bf16.msra.mxu0 0
    %853 = vmatprep.subr.bf16.mxu0 0
    %854 = vmatpush1.bf16.msra.mxu0 0
    %855 = vmatprep.subr.bf16.mxu0 0
    %856 = vmatpush1.bf16.msra.mxu0 0
    %857 = vmatprep.subr.bf16.mxu0 0
    %858 = vmatpush1.bf16.msra.mxu0 0
    %859 = vmatprep.subr.bf16.mxu0 0
    %860 = vmatpush1.bf16.msra.mxu0 0
    %861 = vmatprep.subr.bf16.mxu0 0
    %862 = vmatpush1.bf16.msra.mxu0 0
    %863 = vmatprep.subr.bf16.mxu0 0
    %864 = vmatpush1.bf16.msra.mxu0 0
    %865 = vmatprep.subr.bf16.mxu0 0
    %866 = vmatpush1.bf16.msra.mxu0 0
    %867 = vmatprep.subr.bf16.mxu0 0
    %868 = vmatpush1.bf16.msra.mxu0 0
    %869 = vmatprep.subr.bf16.mxu0 0
    %870 = vmatpush1.bf16.msra.mxu0 0
    %871 = vmatprep.subr.bf16.mxu0 0
    %872 = vmatpush1.bf16.msra.mxu0 0
    %873 = vmatprep.subr.bf16.mxu0 0
    %874 = vmatpush1.bf16.msra.mxu0 0
    %875 = vmatprep.subr.bf16.mxu0 0
    %876 = vmatpush1.bf16.msra.mxu0 0
    %877 = vmatprep.subr.bf16.mxu0 0
    %878 = vmatpush1.bf16.msra.mxu0 0
    %879 = vmatprep.subr.bf16.mxu0 0
    %880 = vmatpush1.bf16.msra.mxu0 0
    %881 = vmatprep.mubr.bf16.mxu0 0
    %882 = vmatmul.mubr.bf16.gmra.mrb[0].mxu0 %v843
    %v883 = vpop.f32.mrb[0].mxu0
    %v884 = vadd.f32 0.0, %v883
    %v885 = vpop.f32.mrb[0].mxu0
    %v886 = vpop.f32.mrb[0].mxu0
    %v887 = vpop.f32.mrb[0].mxu0
    %888 = vdwg.mxu0
    %v889 = vpack.c.bf16 %v884, %v884
    %v890 = vld [vmem:[%s8] sm:$0xf]
    %v891 = vld [vmem:[%s8 + $0x4] sm:$0xf]
    %v892 = vld [vmem:[%s8 + $0x8] sm:$0xf]
    %v893 = vld [vmem:[%s8 + $0xc] sm:$0xf]
    %v898 = vunpack.c.l.b16 %v890
    %v899 = vunpack.c.l.b16 %v891
    %v900 = vunpack.c.l.b16 %v892
    %v901 = vunpack.c.l.b16 %v893
    %v902 = vpack.c.b16 %v899, %v898
    %v903 = vpack.c.b16 %v901, %v900
    %v907 = vsel %vm93, %v889, 0
    %909 = vmatprep.subr.bf16.mxu0 0
    %910 = vmatpush1.bf16.msra.mxu0 %v902
    %911 = vmatprep.subr.bf16.mxu0 0
    %912 = vmatpush1.bf16.msra.mxu0 %v903
    %913 = vmatprep.subr.bf16.mxu0 0
    %914 = vmatpush1.bf16.msra.mxu0 0
    %915 = vmatprep.subr.bf16.mxu0 0
    %916 = vmatpush1.bf16.msra.mxu0 0
    %917 = vmatprep.subr.bf16.mxu0 0
    %918 = vmatpush1.bf16.msra.mxu0 0
    %919 = vmatprep.subr.bf16.mxu0 0
    %920 = vmatpush1.bf16.msra.mxu0 0
    %921 = vmatprep.subr.bf16.mxu0 0
    %922 = vmatpush1.bf16.msra.mxu0 0
    %923 = vmatprep.subr.bf16.mxu0 0
    %924 = vmatpush1.bf16.msra.mxu0 0
    %925 = vmatprep.subr.bf16.mxu0 0
    %926 = vmatpush1.bf16.msra.mxu0 0
    %927 = vmatprep.subr.bf16.mxu0 0
    %928 = vmatpush1.bf16.msra.mxu0 0
    %929 = vmatprep.subr.bf16.mxu0 0
    %930 = vmatpush1.bf16.msra.mxu0 0
    %931 = vmatprep.subr.bf16.mxu0 0
    %932 = vmatpush1.bf16.msra.mxu0 0
    %933 = vmatprep.subr.bf16.mxu0 0
    %934 = vmatpush1.bf16.msra.mxu0 0
    %935 = vmatprep.subr.bf16.mxu0 0
    %936 = vmatpush1.bf16.msra.mxu0 0
    %937 = vmatprep.subr.bf16.mxu0 0
    %938 = vmatpush1.bf16.msra.mxu0 0
    %939 = vmatprep.subr.bf16.mxu0 0
    %940 = vmatpush1.bf16.msra.mxu0 0
    %941 = vmatprep.mubr.bf16.mxu0 0
    %942 = vmatmul.mubr.bf16.gmra.mrb[0].mxu0 %v907
    %v943 = vpop.f32.mrb[0].mxu0
    %v944 = vadd.f32 0.0, %v943
    %v945 = vpop.f32.mrb[0].mxu0
    %v946 = vpop.f32.mrb[0].mxu0
    %v947 = vpop.f32.mrb[0].mxu0
    %948 = vdwg.mxu0
    %v949 = vld [vmem:[%s1] sm:$0x3]
    %951 = vset.pattern.permute.xlu0 0
    %952 = vperm.xlu0 %951, %v949
    %v953 = vpop.permute.xlu0 %952
    %v955 = vmul.f32 %v944, %v953
    %v956 = vld [vmem:[%s9] sm:$0x1]
    %v958 = vlaneseq
    %v959 = vshrl.u32 %v958, 7
    %v960 = vsub.s32 0, %v959
    %v961 = vrot.slane %v956, %v960
    %v963 = vadd.f32 %v955, %v961
    %964 = vst [vmem:[#allocation2] sm:$0x3] %v963
    // Predicated region
    $region42: #{mlpl_encoder_forward.1} parent=1 // pred_check
      _
    $region43: #{mlpl_encoder_forward.1} parent=1 // pred_check_branch
      %966 = sbr.rel (0) target = $region45
    $region44: #{mlpl_encoder_forward.1} parent=1 // pred_region
      %s968 = ssub.s32 32, 32
      %969 = vsyncadd [#allocation3], %s968
      %s971 = sshll.u32 [#allocation2], 4
      %s972 = int_to_ptr.vmem [resolvable:$true] %s971
      %974 = dma.vmem_to_hbm [thread:$0]  %s972, 32, %s10, [#allocation3]
    $region45: #{mlpl_encoder_forward.1} parent=1 // pred_fallthru
      _
    // Predicated region
    $region46: #{mlpl_encoder_forward.1} parent=1 // pred_check
      _
    $region47: #{mlpl_encoder_forward.1} parent=1 // pred_check_branch
      %976 = sbr.rel (0) target = $region49
    $region48: #{mlpl_encoder_forward.1} parent=1 // pred_region
      %977 = dma.done [#allocation3], 32
    $region49: #{mlpl_encoder_forward.1} parent=1 // pred_fallthru
      _
    %978 = vsyncpa [#allocation3], 1

</llo_original>
